<compile_context>
chip_gen: v5e
topology: v5e:2x2
jax: 0.10.0
libtpu: 0.0.40
codegen_flags: <defaults>
</compile_context>

<pallas_src>
from functools import partial

import jax
import jax.numpy as jnp
from jax.experimental import pallas as pl
from jax.experimental.pallas import tpu as pltpu

_SUBLANE = 8  # f32 sublane multiple


# ----------------------------------------------------------------------------
# Fused Pallas kernel: whole forward pass, VMEM resident, single program
# ----------------------------------------------------------------------------
def _traj_fused_kernel(alpha_ref, label_ref, code_ref, end_ref,
                       expw_ref, expb_ref, w0_ref, b0_ref, whh0_ref,
                       wcat_ref, bcat_ref,
                       fc0w_ref, fc0b_ref, fc1w_ref, fc1b_ref,
                       fc2w_ref, fc2b_ref, fcw_ref, fcb_ref,
                       out_ref, *, n_layers, bp):
    """Shapes (all f32):
      alpha_ref : (1, 1) SMEM          shared PReLU slope
      label_ref : (B, C)   code_ref: (B, code_dim)   end_ref: (B, traj)
      expw_ref  : (D, T*D) expb_ref: (1, T*D)        expand Linear (transposed)
      w0_ref    : (D, 4H)  b0_ref  : (1, 4H)   embed folded into layer-0 wih
      whh0_ref  : (H, 4H)                      layer-0 recurrent weight
      wcat_ref  : (max(L-1,1), 2H, 4H)         [wih_l ; whh_l] stacked, l>=1
      bcat_ref  : (max(L-1,1), 1, 4H)
      fc*w/b    : output-head linears
      out_ref   : (B, T*traj)  batch-major: out[b, t*traj:(t+1)*traj] = y(b, t)
      Gate order is [i, f, o, g]; biases are the combined b_ih + b_hh.
    """
    B, C = label_ref.shape
    traj = end_ref.shape[1]
    D = expw_ref.shape[0]
    T = expw_ref.shape[1] // D
    H = whh0_ref.shape[0]
    L = n_layers
    Bp = bp

    alpha = alpha_ref[0, 0]

    def prelu(v):
        return jnp.where(v > 0, v, alpha * v)

    def mm(a, b):
        return jnp.dot(a, b, preferred_element_type=jnp.float32)

    # ---- Prologue (in-kernel): outer product + concat + row padding ---------
    label = label_ref[...]                                   # (B, C)
    codes = code_ref[...]                                    # (B, code_dim)
    parts = [label[:, i:i + 1] * codes for i in range(C)]    # row-major outer product
    parts.append(end_ref[...])                               # (B, traj)
    x = jnp.concatenate(parts, axis=-1)                      # (B, D)
    if Bp > B:                                               # pad to sublane multiple
        x = jnp.concatenate([x, jnp.zeros((Bp - B, D), jnp.float32)], axis=0)

    # ---- Phase 1: expand (1 matmul) + PReLU, then fused embed·wih0 (1 matmul)
    E = prelu(mm(x, expw_ref[...]) + expb_ref[...])          # (Bp, T*D)
    # Restack the per-step lane blocks into a sublane-aligned (T*Bp, D) slab.
    e_slab = jnp.concatenate([E[:, t * D:(t + 1) * D] for t in range(T)], axis=0)
    # Layer-0 gate pre-activations for ALL time steps in one lane-dense matmul.
    G0 = mm(e_slab, w0_ref[...]) + b0_ref[...]               # (T*Bp, 4H)

    # ---- Phase 2: stacked LSTM recurrence (T and L unrolled, small & static)
    whh0 = whh0_ref[...]

    def cell(gates, c_prev):
        s = jax.nn.sigmoid(gates[:, :3 * H])                 # [i | f | o] in one pass
        g = jnp.tanh(gates[:, 3 * H:])
        c_new = s[:, H:2 * H] * c_prev + s[:, :H] * g
        h_new = s[:, 2 * H:3 * H] * jnp.tanh(c_new)
        return h_new, c_new

    h = [jnp.zeros((Bp, H), jnp.float32) for _ in range(L)]
    c = [jnp.zeros((Bp, H), jnp.float32) for _ in range(L)]
    oo_rows = []
    for t in range(T):
        # layer 0: input projection precomputed -> only the recurrent matmul here
        h[0], c[0] = cell(G0[t * Bp:(t + 1) * Bp, :] + mm(h[0], whh0), c[0])
        inp = h[0]
        for l in range(1, L):
            # one fused K=2H matmul instead of two K=H matmuls + add
            z = jnp.concatenate([inp, h[l]], axis=-1)        # (Bp, 2H)
            h[l], c[l] = cell(mm(z, wcat_ref[l - 1]) + bcat_ref[l - 1], c[l])
            inp = h[l]
        oo_rows.append(inp)                                  # (Bp, H)

    # ---- Phase 3: output heads batched over the whole (T*Bp, H) slab --------
    oo = jnp.concatenate(oo_rows, axis=0)                    # (T*Bp, H)
    y = prelu(mm(oo, fc0w_ref[...]) + fc0b_ref[...])
    y = prelu(mm(y, fc1w_ref[...]) + fc1b_ref[...])          # fc1 + standalone PReLU fused
    y = prelu(mm(y, fc2w_ref[...]) + fc2b_ref[...])
    y = mm(y, fcw_ref[...]) + fcb_ref[...]                   # (T*Bp, traj)

    # ---- Emit batch-major so the wrapper epilogue is a zero-copy reshape ----
    out_row = jnp.concatenate([y[t * Bp:t * Bp + B, :] for t in range(T)], axis=-1)
    out_ref[...] = out_row.astype(out_ref.dtype)             # (B, T*traj)


# ----------------------------------------------------------------------------
# Parameter init (module-style, deterministic synthetic) + one-time folding
# ----------------------------------------------------------------------------
def init_params(code_dim, hidden_dim, n_layers, trajectory_dim, motion_length,
                num_class, seed=42):
    D = num_class * code_dim + trajectory_dim                # input_dim
    T, H, L = motion_length, hidden_dim, n_layers
    key = jax.random.PRNGKey(seed)

    def nxt():
        nonlocal key
        key, sub = jax.random.split(key)
        return sub

    def unif(shape, fan_in):
        s = float(fan_in) ** -0.5
        return jax.random.uniform(nxt(), shape, jnp.float32, -s, s)

    return {
        # expand: nn.Linear(D, D*T) stored transposed: expand_w[i, n] == W_pt[n, i]
        "expand_w": unif((D, T * D), D), "expand_b": unif((1, T * D), D),
        "embed_w": unif((D, H), D), "embed_b": unif((1, H), D),
        # LSTM, gate order [i, f, o, g] (PyTorch is [i, f, g, o]); weights stored
        # (in_features, 4H); lstm_b is the combined b_ih + b_hh.  A real checkpoint
        # import must permute gates, transpose, and sum the two biases.
        "lstm_wih": unif((L, H, 4 * H), H),
        "lstm_whh": unif((L, H, 4 * H), H),
        "lstm_b": unif((L, 1, 4 * H), H),
        "fc0_w": unif((H, H), H), "fc0_b": unif((1, H), H),
        "fc1_w": unif((H, H), H), "fc1_b": unif((1, H), H),
        "fc2_w": unif((H, H), H), "fc2_b": unif((1, H), H),
        "fc_w": unif((H, trajectory_dim), H), "fc_b": unif((1, trajectory_dim), H),
        # single shared nn.PReLU() -> one scalar alpha (default 0.25)
        "alpha": jnp.full((1, 1), 0.25, jnp.float32),
    }


def prepare_kernel_params(p, n_layers):
    """One-time weight folding (run once, outside the per-call path)."""
    wih, whh, lb = p["lstm_wih"], p["lstm_whh"], p["lstm_b"]
    H = whh.shape[1]
    # embedding folded into layer-0 input projection (no nonlinearity between)
    w0 = p["embed_w"] @ wih[0]                               # (D, 4H)
    b0 = p["embed_b"] @ wih[0] + lb[0]                       # (1, 4H)
    if n_layers > 1:
        wcat = jnp.concatenate([wih[1:], whh[1:]], axis=1)   # (L-1, 2H, 4H)
        bcat = lb[1:]                                        # (L-1, 1, 4H)
    else:
        wcat = jnp.zeros((1, 2 * H, 4 * H), jnp.float32)     # unused placeholder
        bcat = jnp.zeros((1, 1, 4 * H), jnp.float32)
    return {
        "alpha": p["alpha"],
        "expand_w": p["expand_w"], "expand_b": p["expand_b"],
        "w0": w0, "b0": b0, "whh0": whh[0],
        "wcat": wcat, "bcat": bcat,
        "fc0_w": p["fc0_w"], "fc0_b": p["fc0_b"],
        "fc1_w": p["fc1_w"], "fc1_b": p["fc1_b"],
        "fc2_w": p["fc2_w"], "fc2_b": p["fc2_b"],
        "fc_w": p["fc_w"], "fc_b": p["fc_b"],
    }


# ----------------------------------------------------------------------------
# Forward: one fused pallas_call; epilogue is a free row-major reshape
# ----------------------------------------------------------------------------
def traj_generator_forward(params, batch, label, end_point, *,
                           motion_length, trajectory_dim, n_layers,
                           use_end=True):
    B = batch.shape[0]
    T, traj = motion_length, trajectory_dim
    if not use_end:
        end_point = jnp.zeros_like(end_point)                # reference: end_point * 0
    bp = -(-B // _SUBLANE) * _SUBLANE                        # rows padded inside kernel

    kernel = partial(_traj_fused_kernel, n_layers=n_layers, bp=bp)
    out = pl.pallas_call(
        kernel,
        out_shape=jax.ShapeDtypeStruct((B, T * traj), jnp.float32),
        in_specs=[pl.BlockSpec(memory_space=pltpu.MemorySpace.SMEM)]       # alpha scalar
                 + [pl.BlockSpec(memory_space=pltpu.MemorySpace.VMEM)] * 18,
        out_specs=pl.BlockSpec(memory_space=pltpu.MemorySpace.VMEM),
    )(params["alpha"], label, batch, end_point,
      params["expand_w"], params["expand_b"],
      params["w0"], params["b0"], params["whh0"],
      params["wcat"], params["bcat"],
      params["fc0_w"], params["fc0_b"],
      params["fc1_w"], params["fc1_b"],
      params["fc2_w"], params["fc2_b"],
      params["fc_w"], params["fc_b"])

    # Rows are already batch-major; row-major (B, T*traj) -> (B, T, traj) is a
    # zero-copy reshape.  (oo.squeeze() in the reference is a no-op for B > 1.)
    return out.reshape(B, T, traj)


# ----------------------------------------------------------------------------
if __name__ == "__main__":
    B = 2
    code_dim = 4
    hidden_dim = 32
    n_layers = 2
    trajectory_dim = 2
    motion_length = 8
    num_class = 3
    use_end = True

    key = jax.random.PRNGKey(0)
    kb, kl, ke = jax.random.split(key, 3)
    batch = jax.random.normal(kb, (B, code_dim), jnp.float32)          # class-embedding codes
    label = jax.nn.one_hot(
        jax.random.randint(kl, (B,), 0, num_class), num_class, dtype=jnp.float32)
    end_point = jax.random.normal(ke, (B, trajectory_dim), jnp.float32)

    module_params = init_params(code_dim, hidden_dim, n_layers, trajectory_dim,
                                motion_length, num_class)
    kparams = prepare_kernel_params(module_params, n_layers)           # one-time fold

    fwd = jax.jit(partial(traj_generator_forward,
                          motion_length=motion_length,
                          trajectory_dim=trajectory_dim,
                          n_layers=n_layers,
                          use_end=use_end))
    out = jax.block_until_ready(fwd(kparams, batch, label, end_point))

    assert out.shape == (B, motion_length, trajectory_dim), out.shape
    assert jnp.all(jnp.isfinite(out))
    print("KERNEL_OK")
</pallas_src>

<mosaic_0001>
module attributes {stable_mosaic.version = 11 : i64} {
  func.func @_traj_fused_kernel(%arg0: memref<1x1xf32, #tpu.memory_space<smem>>, %arg1: memref<2x3xf32, #tpu.memory_space<vmem>>, %arg2: memref<2x4xf32, #tpu.memory_space<vmem>>, %arg3: memref<2x2xf32, #tpu.memory_space<vmem>>, %arg4: memref<14x112xf32, #tpu.memory_space<vmem>>, %arg5: memref<1x112xf32, #tpu.memory_space<vmem>>, %arg6: memref<14x128xf32, #tpu.memory_space<vmem>>, %arg7: memref<1x128xf32, #tpu.memory_space<vmem>>, %arg8: memref<32x128xf32, #tpu.memory_space<vmem>>, %arg9: memref<1x64x128xf32, #tpu.memory_space<vmem>>, %arg10: memref<1x1x128xf32, #tpu.memory_space<vmem>>, %arg11: memref<32x32xf32, #tpu.memory_space<vmem>>, %arg12: memref<1x32xf32, #tpu.memory_space<vmem>>, %arg13: memref<32x32xf32, #tpu.memory_space<vmem>>, %arg14: memref<1x32xf32, #tpu.memory_space<vmem>>, %arg15: memref<32x32xf32, #tpu.memory_space<vmem>>, %arg16: memref<1x32xf32, #tpu.memory_space<vmem>>, %arg17: memref<32x2xf32, #tpu.memory_space<vmem>>, %arg18: memref<1x2xf32, #tpu.memory_space<vmem>>, %arg19: memref<2x16xf32, #tpu.memory_space<vmem>>) attributes {dimension_semantics = [], scalar_prefetch = 0 : i64, scratch_operands = 0 : i64, tpu.core_type = #tpu.core_type<tc>} {
    %c0 = arith.constant 0 : index
    %c0_0 = arith.constant 0 : index
    %0 = memref.load %arg0[%c0, %c0_0] : memref<1x1xf32, #tpu.memory_space<smem>>
    %c0_1 = arith.constant 0 : index
    %c0_2 = arith.constant 0 : index
    %1 = vector.load %arg1[%c0_1, %c0_2] : memref<2x3xf32, #tpu.memory_space<vmem>>, vector<2x3xf32>
    %c0_3 = arith.constant 0 : index
    %c0_4 = arith.constant 0 : index
    %2 = vector.load %arg2[%c0_3, %c0_4] : memref<2x4xf32, #tpu.memory_space<vmem>>, vector<2x4xf32>
    %3 = vector.extract_strided_slice %1 {offsets = [0, 0], sizes = [2, 1], strides = [1, 1]} : vector<2x3xf32> to vector<2x1xf32>
    %4 = vector.broadcast %3 : vector<2x1xf32> to vector<2x4xf32>
    %5 = arith.mulf %4, %2 : vector<2x4xf32>
    %6 = vector.extract_strided_slice %1 {offsets = [0, 1], sizes = [2, 1], strides = [1, 1]} : vector<2x3xf32> to vector<2x1xf32>
    %7 = vector.broadcast %6 : vector<2x1xf32> to vector<2x4xf32>
    %8 = arith.mulf %7, %2 : vector<2x4xf32>
    %9 = vector.extract_strided_slice %1 {offsets = [0, 2], sizes = [2, 1], strides = [1, 1]} : vector<2x3xf32> to vector<2x1xf32>
    %10 = vector.broadcast %9 : vector<2x1xf32> to vector<2x4xf32>
    %11 = arith.mulf %10, %2 : vector<2x4xf32>
    %c0_5 = arith.constant 0 : index
    %c0_6 = arith.constant 0 : index
    %12 = vector.load %arg3[%c0_5, %c0_6] : memref<2x2xf32, #tpu.memory_space<vmem>>, vector<2x2xf32>
    %13 = tpu.concatenate %5, %8, %11, %12 in 1 : vector<2x4xf32>, vector<2x4xf32>, vector<2x4xf32>, vector<2x2xf32> -> vector<2x14xf32>
    %cst = arith.constant 0.000000e+00 : f32
    %14 = vector.broadcast %cst : f32 to vector<6x14xf32>
    %15 = tpu.concatenate %13, %14 in 0 : vector<2x14xf32>, vector<6x14xf32> -> vector<8x14xf32>
    %c0_7 = arith.constant 0 : index
    %c0_8 = arith.constant 0 : index
    %16 = vector.load %arg4[%c0_7, %c0_8] : memref<14x112xf32, #tpu.memory_space<vmem>>, vector<14x112xf32>
    %cst_9 = arith.constant dense<0.000000e+00> : vector<8x112xf32>
    %17 = tpu.matmul %15, %16, %cst_9 {dimension_numbers = #tpu.dot_dimension_numbers<[1], [0], [0], [1], [0, 0, 1, 1], [], []>} : vector<8x14xf32>, vector<14x112xf32>, vector<8x112xf32> -> vector<8x112xf32>
    %c0_10 = arith.constant 0 : index
    %c0_11 = arith.constant 0 : index
    %18 = vector.load %arg5[%c0_10, %c0_11] : memref<1x112xf32, #tpu.memory_space<vmem>>, vector<1x112xf32>
    %19 = vector.broadcast %18 : vector<1x112xf32> to vector<8x112xf32>
    %20 = arith.addf %17, %19 : vector<8x112xf32>
    %cst_12 = arith.constant 0.000000e+00 : f32
    %21 = vector.broadcast %cst_12 : f32 to vector<8x112xf32>
    %22 = arith.cmpf ogt, %20, %21 : vector<8x112xf32>
    %23 = vector.broadcast %0 : f32 to vector<8x112xf32>
    %24 = arith.mulf %23, %20 : vector<8x112xf32>
    %25 = arith.select %22, %20, %24 : vector<8x112xi1>, vector<8x112xf32>
    %26 = vector.extract_strided_slice %25 {offsets = [0, 0], sizes = [8, 14], strides = [1, 1]} : vector<8x112xf32> to vector<8x14xf32>
    %27 = vector.extract_strided_slice %25 {offsets = [0, 14], sizes = [8, 14], strides = [1, 1]} : vector<8x112xf32> to vector<8x14xf32>
    %28 = vector.extract_strided_slice %25 {offsets = [0, 28], sizes = [8, 14], strides = [1, 1]} : vector<8x112xf32> to vector<8x14xf32>
    %29 = vector.extract_strided_slice %25 {offsets = [0, 42], sizes = [8, 14], strides = [1, 1]} : vector<8x112xf32> to vector<8x14xf32>
    %30 = vector.extract_strided_slice %25 {offsets = [0, 56], sizes = [8, 14], strides = [1, 1]} : vector<8x112xf32> to vector<8x14xf32>
    %31 = vector.extract_strided_slice %25 {offsets = [0, 70], sizes = [8, 14], strides = [1, 1]} : vector<8x112xf32> to vector<8x14xf32>
    %32 = vector.extract_strided_slice %25 {offsets = [0, 84], sizes = [8, 14], strides = [1, 1]} : vector<8x112xf32> to vector<8x14xf32>
    %33 = vector.extract_strided_slice %25 {offsets = [0, 98], sizes = [8, 14], strides = [1, 1]} : vector<8x112xf32> to vector<8x14xf32>
    %34 = tpu.concatenate %26, %27, %28, %29, %30, %31, %32, %33 in 0 : vector<8x14xf32>, vector<8x14xf32>, vector<8x14xf32>, vector<8x14xf32>, vector<8x14xf32>, vector<8x14xf32>, vector<8x14xf32>, vector<8x14xf32> -> vector<64x14xf32>
    %c0_13 = arith.constant 0 : index
    %c0_14 = arith.constant 0 : index
    %35 = vector.load %arg6[%c0_13, %c0_14] : memref<14x128xf32, #tpu.memory_space<vmem>>, vector<14x128xf32>
    %cst_15 = arith.constant dense<0.000000e+00> : vector<64x128xf32>
    %36 = tpu.matmul %34, %35, %cst_15 {dimension_numbers = #tpu.dot_dimension_numbers<[1], [0], [0], [1], [0, 0, 1, 1], [], []>} : vector<64x14xf32>, vector<14x128xf32>, vector<64x128xf32> -> vector<64x128xf32>
    %c0_16 = arith.constant 0 : index
    %c0_17 = arith.constant 0 : index
    %37 = vector.load %arg7[%c0_16, %c0_17] : memref<1x128xf32, #tpu.memory_space<vmem>>, vector<1x128xf32>
    %38 = vector.broadcast %37 : vector<1x128xf32> to vector<64x128xf32>
    %39 = arith.addf %36, %38 : vector<64x128xf32>
    %c0_18 = arith.constant 0 : index
    %c0_19 = arith.constant 0 : index
    %40 = vector.load %arg8[%c0_18, %c0_19] : memref<32x128xf32, #tpu.memory_space<vmem>>, vector<32x128xf32>
    %cst_20 = arith.constant 0.000000e+00 : f32
    %41 = vector.broadcast %cst_20 : f32 to vector<8x32xf32>
    %cst_21 = arith.constant 0.000000e+00 : f32
    %42 = vector.broadcast %cst_21 : f32 to vector<8x32xf32>
    %cst_22 = arith.constant 0.000000e+00 : f32
    %43 = vector.broadcast %cst_22 : f32 to vector<8x32xf32>
    %cst_23 = arith.constant 0.000000e+00 : f32
    %44 = vector.broadcast %cst_23 : f32 to vector<8x32xf32>
    %45 = vector.extract_strided_slice %39 {offsets = [0, 0], sizes = [8, 128], strides = [1, 1]} : vector<64x128xf32> to vector<8x128xf32>
    %cst_24 = arith.constant dense<0.000000e+00> : vector<8x128xf32>
    %46 = tpu.matmul %41, %40, %cst_24 {dimension_numbers = #tpu.dot_dimension_numbers<[1], [0], [0], [1], [0, 0, 1, 1], [], []>} : vector<8x32xf32>, vector<32x128xf32>, vector<8x128xf32> -> vector<8x128xf32>
    %47 = arith.addf %45, %46 : vector<8x128xf32>
    %48 = vector.extract_strided_slice %47 {offsets = [0, 0], sizes = [8, 96], strides = [1, 1]} : vector<8x128xf32> to vector<8x96xf32>
    %49 = arith.negf %48 : vector<8x96xf32>
    %50 = math.exp %49 : vector<8x96xf32>
    %cst_25 = arith.constant 1.000000e+00 : f32
    %51 = vector.broadcast %cst_25 : f32 to vector<8x96xf32>
    %52 = arith.addf %51, %50 : vector<8x96xf32>
    %53 = arith.divf %51, %52 : vector<8x96xf32>
    %54 = vector.extract_strided_slice %47 {offsets = [0, 96], sizes = [8, 32], strides = [1, 1]} : vector<8x128xf32> to vector<8x32xf32>
    %55 = math.tanh %54 : vector<8x32xf32>
    %56 = vector.extract_strided_slice %53 {offsets = [0, 32], sizes = [8, 32], strides = [1, 1]} : vector<8x96xf32> to vector<8x32xf32>
    %57 = arith.mulf %56, %43 : vector<8x32xf32>
    %58 = vector.extract_strided_slice %53 {offsets = [0, 0], sizes = [8, 32], strides = [1, 1]} : vector<8x96xf32> to vector<8x32xf32>
    %59 = arith.mulf %58, %55 : vector<8x32xf32>
    %60 = arith.addf %57, %59 : vector<8x32xf32>
    %61 = vector.extract_strided_slice %53 {offsets = [0, 64], sizes = [8, 32], strides = [1, 1]} : vector<8x96xf32> to vector<8x32xf32>
    %62 = math.tanh %60 : vector<8x32xf32>
    %63 = arith.mulf %61, %62 : vector<8x32xf32>
    %64 = tpu.concatenate %63, %42 in 1 : vector<8x32xf32>, vector<8x32xf32> -> vector<8x64xf32>
    %c0_26 = arith.constant 0 : index
    %c0_27 = arith.constant 0 : index
    %c0_28 = arith.constant 0 : index
    %65 = vector.load %arg9[%c0_26, %c0_27, %c0_28] : memref<1x64x128xf32, #tpu.memory_space<vmem>>, vector<1x64x128xf32>
    %66 = vector.shape_cast %65 : vector<1x64x128xf32> to vector<64x128xf32>
    %cst_29 = arith.constant dense<0.000000e+00> : vector<8x128xf32>
    %67 = tpu.matmul %64, %66, %cst_29 {dimension_numbers = #tpu.dot_dimension_numbers<[1], [0], [0], [1], [0, 0, 1, 1], [], []>} : vector<8x64xf32>, vector<64x128xf32>, vector<8x128xf32> -> vector<8x128xf32>
    %c0_30 = arith.constant 0 : index
    %c0_31 = arith.constant 0 : index
    %c0_32 = arith.constant 0 : index
    %68 = vector.load %arg10[%c0_30, %c0_31, %c0_32] : memref<1x1x128xf32, #tpu.memory_space<vmem>>, vector<1x1x128xf32>
    %69 = vector.shape_cast %68 : vector<1x1x128xf32> to vector<1x128xf32>
    %70 = vector.broadcast %69 : vector<1x128xf32> to vector<8x128xf32>
    %71 = arith.addf %67, %70 : vector<8x128xf32>
    %72 = vector.extract_strided_slice %71 {offsets = [0, 0], sizes = [8, 96], strides = [1, 1]} : vector<8x128xf32> to vector<8x96xf32>
    %73 = arith.negf %72 : vector<8x96xf32>
    %74 = math.exp %73 : vector<8x96xf32>
    %cst_33 = arith.constant 1.000000e+00 : f32
    %75 = vector.broadcast %cst_33 : f32 to vector<8x96xf32>
    %76 = arith.addf %75, %74 : vector<8x96xf32>
    %77 = arith.divf %75, %76 : vector<8x96xf32>
    %78 = vector.extract_strided_slice %71 {offsets = [0, 96], sizes = [8, 32], strides = [1, 1]} : vector<8x128xf32> to vector<8x32xf32>
    %79 = math.tanh %78 : vector<8x32xf32>
    %80 = vector.extract_strided_slice %77 {offsets = [0, 32], sizes = [8, 32], strides = [1, 1]} : vector<8x96xf32> to vector<8x32xf32>
    %81 = arith.mulf %80, %44 : vector<8x32xf32>
    %82 = vector.extract_strided_slice %77 {offsets = [0, 0], sizes = [8, 32], strides = [1, 1]} : vector<8x96xf32> to vector<8x32xf32>
    %83 = arith.mulf %82, %79 : vector<8x32xf32>
    %84 = arith.addf %81, %83 : vector<8x32xf32>
    %85 = vector.extract_strided_slice %77 {offsets = [0, 64], sizes = [8, 32], strides = [1, 1]} : vector<8x96xf32> to vector<8x32xf32>
    %86 = math.tanh %84 : vector<8x32xf32>
    %87 = arith.mulf %85, %86 : vector<8x32xf32>
    %88 = vector.extract_strided_slice %39 {offsets = [8, 0], sizes = [8, 128], strides = [1, 1]} : vector<64x128xf32> to vector<8x128xf32>
    %cst_34 = arith.constant dense<0.000000e+00> : vector<8x128xf32>
    %89 = tpu.matmul %63, %40, %cst_34 {dimension_numbers = #tpu.dot_dimension_numbers<[1], [0], [0], [1], [0, 0, 1, 1], [], []>} : vector<8x32xf32>, vector<32x128xf32>, vector<8x128xf32> -> vector<8x128xf32>
    %90 = arith.addf %88, %89 : vector<8x128xf32>
    %91 = vector.extract_strided_slice %90 {offsets = [0, 0], sizes = [8, 96], strides = [1, 1]} : vector<8x128xf32> to vector<8x96xf32>
    %92 = arith.negf %91 : vector<8x96xf32>
    %93 = math.exp %92 : vector<8x96xf32>
    %cst_35 = arith.constant 1.000000e+00 : f32
    %94 = vector.broadcast %cst_35 : f32 to vector<8x96xf32>
    %95 = arith.addf %94, %93 : vector<8x96xf32>
    %96 = arith.divf %94, %95 : vector<8x96xf32>
    %97 = vector.extract_strided_slice %90 {offsets = [0, 96], sizes = [8, 32], strides = [1, 1]} : vector<8x128xf32> to vector<8x32xf32>
    %98 = math.tanh %97 : vector<8x32xf32>
    %99 = vector.extract_strided_slice %96 {offsets = [0, 32], sizes = [8, 32], strides = [1, 1]} : vector<8x96xf32> to vector<8x32xf32>
    %100 = arith.mulf %99, %60 : vector<8x32xf32>
    %101 = vector.extract_strided_slice %96 {offsets = [0, 0], sizes = [8, 32], strides = [1, 1]} : vector<8x96xf32> to vector<8x32xf32>
    %102 = arith.mulf %101, %98 : vector<8x32xf32>
    %103 = arith.addf %100, %102 : vector<8x32xf32>
    %104 = vector.extract_strided_slice %96 {offsets = [0, 64], sizes = [8, 32], strides = [1, 1]} : vector<8x96xf32> to vector<8x32xf32>
    %105 = math.tanh %103 : vector<8x32xf32>
    %106 = arith.mulf %104, %105 : vector<8x32xf32>
    %107 = tpu.concatenate %106, %87 in 1 : vector<8x32xf32>, vector<8x32xf32> -> vector<8x64xf32>
    %c0_36 = arith.constant 0 : index
    %c0_37 = arith.constant 0 : index
    %c0_38 = arith.constant 0 : index
    %108 = vector.load %arg9[%c0_36, %c0_37, %c0_38] : memref<1x64x128xf32, #tpu.memory_space<vmem>>, vector<1x64x128xf32>
    %109 = vector.shape_cast %108 : vector<1x64x128xf32> to vector<64x128xf32>
    %cst_39 = arith.constant dense<0.000000e+00> : vector<8x128xf32>
    %110 = tpu.matmul %107, %109, %cst_39 {dimension_numbers = #tpu.dot_dimension_numbers<[1], [0], [0], [1], [0, 0, 1, 1], [], []>} : vector<8x64xf32>, vector<64x128xf32>, vector<8x128xf32> -> vector<8x128xf32>
    %c0_40 = arith.constant 0 : index
    %c0_41 = arith.constant 0 : index
    %c0_42 = arith.constant 0 : index
    %111 = vector.load %arg10[%c0_40, %c0_41, %c0_42] : memref<1x1x128xf32, #tpu.memory_space<vmem>>, vector<1x1x128xf32>
    %112 = vector.shape_cast %111 : vector<1x1x128xf32> to vector<1x128xf32>
    %113 = vector.broadcast %112 : vector<1x128xf32> to vector<8x128xf32>
    %114 = arith.addf %110, %113 : vector<8x128xf32>
    %115 = vector.extract_strided_slice %114 {offsets = [0, 0], sizes = [8, 96], strides = [1, 1]} : vector<8x128xf32> to vector<8x96xf32>
    %116 = arith.negf %115 : vector<8x96xf32>
    %117 = math.exp %116 : vector<8x96xf32>
    %cst_43 = arith.constant 1.000000e+00 : f32
    %118 = vector.broadcast %cst_43 : f32 to vector<8x96xf32>
    %119 = arith.addf %118, %117 : vector<8x96xf32>
    %120 = arith.divf %118, %119 : vector<8x96xf32>
    %121 = vector.extract_strided_slice %114 {offsets = [0, 96], sizes = [8, 32], strides = [1, 1]} : vector<8x128xf32> to vector<8x32xf32>
    %122 = math.tanh %121 : vector<8x32xf32>
    %123 = vector.extract_strided_slice %120 {offsets = [0, 32], sizes = [8, 32], strides = [1, 1]} : vector<8x96xf32> to vector<8x32xf32>
    %124 = arith.mulf %123, %84 : vector<8x32xf32>
    %125 = vector.extract_strided_slice %120 {offsets = [0, 0], sizes = [8, 32], strides = [1, 1]} : vector<8x96xf32> to vector<8x32xf32>
    %126 = arith.mulf %125, %122 : vector<8x32xf32>
    %127 = arith.addf %124, %126 : vector<8x32xf32>
    %128 = vector.extract_strided_slice %120 {offsets = [0, 64], sizes = [8, 32], strides = [1, 1]} : vector<8x96xf32> to vector<8x32xf32>
    %129 = math.tanh %127 : vector<8x32xf32>
    %130 = arith.mulf %128, %129 : vector<8x32xf32>
    %131 = vector.extract_strided_slice %39 {offsets = [16, 0], sizes = [8, 128], strides = [1, 1]} : vector<64x128xf32> to vector<8x128xf32>
    %cst_44 = arith.constant dense<0.000000e+00> : vector<8x128xf32>
    %132 = tpu.matmul %106, %40, %cst_44 {dimension_numbers = #tpu.dot_dimension_numbers<[1], [0], [0], [1], [0, 0, 1, 1], [], []>} : vector<8x32xf32>, vector<32x128xf32>, vector<8x128xf32> -> vector<8x128xf32>
    %133 = arith.addf %131, %132 : vector<8x128xf32>
    %134 = vector.extract_strided_slice %133 {offsets = [0, 0], sizes = [8, 96], strides = [1, 1]} : vector<8x128xf32> to vector<8x96xf32>
    %135 = arith.negf %134 : vector<8x96xf32>
    %136 = math.exp %135 : vector<8x96xf32>
    %cst_45 = arith.constant 1.000000e+00 : f32
    %137 = vector.broadcast %cst_45 : f32 to vector<8x96xf32>
    %138 = arith.addf %137, %136 : vector<8x96xf32>
    %139 = arith.divf %137, %138 : vector<8x96xf32>
    %140 = vector.extract_strided_slice %133 {offsets = [0, 96], sizes = [8, 32], strides = [1, 1]} : vector<8x128xf32> to vector<8x32xf32>
    %141 = math.tanh %140 : vector<8x32xf32>
    %142 = vector.extract_strided_slice %139 {offsets = [0, 32], sizes = [8, 32], strides = [1, 1]} : vector<8x96xf32> to vector<8x32xf32>
    %143 = arith.mulf %142, %103 : vector<8x32xf32>
    %144 = vector.extract_strided_slice %139 {offsets = [0, 0], sizes = [8, 32], strides = [1, 1]} : vector<8x96xf32> to vector<8x32xf32>
    %145 = arith.mulf %144, %141 : vector<8x32xf32>
    %146 = arith.addf %143, %145 : vector<8x32xf32>
    %147 = vector.extract_strided_slice %139 {offsets = [0, 64], sizes = [8, 32], strides = [1, 1]} : vector<8x96xf32> to vector<8x32xf32>
    %148 = math.tanh %146 : vector<8x32xf32>
    %149 = arith.mulf %147, %148 : vector<8x32xf32>
    %150 = tpu.concatenate %149, %130 in 1 : vector<8x32xf32>, vector<8x32xf32> -> vector<8x64xf32>
    %c0_46 = arith.constant 0 : index
    %c0_47 = arith.constant 0 : index
    %c0_48 = arith.constant 0 : index
    %151 = vector.load %arg9[%c0_46, %c0_47, %c0_48] : memref<1x64x128xf32, #tpu.memory_space<vmem>>, vector<1x64x128xf32>
    %152 = vector.shape_cast %151 : vector<1x64x128xf32> to vector<64x128xf32>
    %cst_49 = arith.constant dense<0.000000e+00> : vector<8x128xf32>
    %153 = tpu.matmul %150, %152, %cst_49 {dimension_numbers = #tpu.dot_dimension_numbers<[1], [0], [0], [1], [0, 0, 1, 1], [], []>} : vector<8x64xf32>, vector<64x128xf32>, vector<8x128xf32> -> vector<8x128xf32>
    %c0_50 = arith.constant 0 : index
    %c0_51 = arith.constant 0 : index
    %c0_52 = arith.constant 0 : index
    %154 = vector.load %arg10[%c0_50, %c0_51, %c0_52] : memref<1x1x128xf32, #tpu.memory_space<vmem>>, vector<1x1x128xf32>
    %155 = vector.shape_cast %154 : vector<1x1x128xf32> to vector<1x128xf32>
    %156 = vector.broadcast %155 : vector<1x128xf32> to vector<8x128xf32>
    %157 = arith.addf %153, %156 : vector<8x128xf32>
    %158 = vector.extract_strided_slice %157 {offsets = [0, 0], sizes = [8, 96], strides = [1, 1]} : vector<8x128xf32> to vector<8x96xf32>
    %159 = arith.negf %158 : vector<8x96xf32>
    %160 = math.exp %159 : vector<8x96xf32>
    %cst_53 = arith.constant 1.000000e+00 : f32
    %161 = vector.broadcast %cst_53 : f32 to vector<8x96xf32>
    %162 = arith.addf %161, %160 : vector<8x96xf32>
    %163 = arith.divf %161, %162 : vector<8x96xf32>
    %164 = vector.extract_strided_slice %157 {offsets = [0, 96], sizes = [8, 32], strides = [1, 1]} : vector<8x128xf32> to vector<8x32xf32>
    %165 = math.tanh %164 : vector<8x32xf32>
    %166 = vector.extract_strided_slice %163 {offsets = [0, 32], sizes = [8, 32], strides = [1, 1]} : vector<8x96xf32> to vector<8x32xf32>
    %167 = arith.mulf %166, %127 : vector<8x32xf32>
    %168 = vector.extract_strided_slice %163 {offsets = [0, 0], sizes = [8, 32], strides = [1, 1]} : vector<8x96xf32> to vector<8x32xf32>
    %169 = arith.mulf %168, %165 : vector<8x32xf32>
    %170 = arith.addf %167, %169 : vector<8x32xf32>
    %171 = vector.extract_strided_slice %163 {offsets = [0, 64], sizes = [8, 32], strides = [1, 1]} : vector<8x96xf32> to vector<8x32xf32>
    %172 = math.tanh %170 : vector<8x32xf32>
    %173 = arith.mulf %171, %172 : vector<8x32xf32>
    %174 = vector.extract_strided_slice %39 {offsets = [24, 0], sizes = [8, 128], strides = [1, 1]} : vector<64x128xf32> to vector<8x128xf32>
    %cst_54 = arith.constant dense<0.000000e+00> : vector<8x128xf32>
    %175 = tpu.matmul %149, %40, %cst_54 {dimension_numbers = #tpu.dot_dimension_numbers<[1], [0], [0], [1], [0, 0, 1, 1], [], []>} : vector<8x32xf32>, vector<32x128xf32>, vector<8x128xf32> -> vector<8x128xf32>
    %176 = arith.addf %174, %175 : vector<8x128xf32>
    %177 = vector.extract_strided_slice %176 {offsets = [0, 0], sizes = [8, 96], strides = [1, 1]} : vector<8x128xf32> to vector<8x96xf32>
    %178 = arith.negf %177 : vector<8x96xf32>
    %179 = math.exp %178 : vector<8x96xf32>
    %cst_55 = arith.constant 1.000000e+00 : f32
    %180 = vector.broadcast %cst_55 : f32 to vector<8x96xf32>
    %181 = arith.addf %180, %179 : vector<8x96xf32>
    %182 = arith.divf %180, %181 : vector<8x96xf32>
    %183 = vector.extract_strided_slice %176 {offsets = [0, 96], sizes = [8, 32], strides = [1, 1]} : vector<8x128xf32> to vector<8x32xf32>
    %184 = math.tanh %183 : vector<8x32xf32>
    %185 = vector.extract_strided_slice %182 {offsets = [0, 32], sizes = [8, 32], strides = [1, 1]} : vector<8x96xf32> to vector<8x32xf32>
    %186 = arith.mulf %185, %146 : vector<8x32xf32>
    %187 = vector.extract_strided_slice %182 {offsets = [0, 0], sizes = [8, 32], strides = [1, 1]} : vector<8x96xf32> to vector<8x32xf32>
    %188 = arith.mulf %187, %184 : vector<8x32xf32>
    %189 = arith.addf %186, %188 : vector<8x32xf32>
    %190 = vector.extract_strided_slice %182 {offsets = [0, 64], sizes = [8, 32], strides = [1, 1]} : vector<8x96xf32> to vector<8x32xf32>
    %191 = math.tanh %189 : vector<8x32xf32>
    %192 = arith.mulf %190, %191 : vector<8x32xf32>
    %193 = tpu.concatenate %192, %173 in 1 : vector<8x32xf32>, vector<8x32xf32> -> vector<8x64xf32>
    %c0_56 = arith.constant 0 : index
    %c0_57 = arith.constant 0 : index
    %c0_58 = arith.constant 0 : index
    %194 = vector.load %arg9[%c0_56, %c0_57, %c0_58] : memref<1x64x128xf32, #tpu.memory_space<vmem>>, vector<1x64x128xf32>
    %195 = vector.shape_cast %194 : vector<1x64x128xf32> to vector<64x128xf32>
    %cst_59 = arith.constant dense<0.000000e+00> : vector<8x128xf32>
    %196 = tpu.matmul %193, %195, %cst_59 {dimension_numbers = #tpu.dot_dimension_numbers<[1], [0], [0], [1], [0, 0, 1, 1], [], []>} : vector<8x64xf32>, vector<64x128xf32>, vector<8x128xf32> -> vector<8x128xf32>
    %c0_60 = arith.constant 0 : index
    %c0_61 = arith.constant 0 : index
    %c0_62 = arith.constant 0 : index
    %197 = vector.load %arg10[%c0_60, %c0_61, %c0_62] : memref<1x1x128xf32, #tpu.memory_space<vmem>>, vector<1x1x128xf32>
    %198 = vector.shape_cast %197 : vector<1x1x128xf32> to vector<1x128xf32>
    %199 = vector.broadcast %198 : vector<1x128xf32> to vector<8x128xf32>
    %200 = arith.addf %196, %199 : vector<8x128xf32>
    %201 = vector.extract_strided_slice %200 {offsets = [0, 0], sizes = [8, 96], strides = [1, 1]} : vector<8x128xf32> to vector<8x96xf32>
    %202 = arith.negf %201 : vector<8x96xf32>
    %203 = math.exp %202 : vector<8x96xf32>
    %cst_63 = arith.constant 1.000000e+00 : f32
    %204 = vector.broadcast %cst_63 : f32 to vector<8x96xf32>
    %205 = arith.addf %204, %203 : vector<8x96xf32>
    %206 = arith.divf %204, %205 : vector<8x96xf32>
    %207 = vector.extract_strided_slice %200 {offsets = [0, 96], sizes = [8, 32], strides = [1, 1]} : vector<8x128xf32> to vector<8x32xf32>
    %208 = math.tanh %207 : vector<8x32xf32>
    %209 = vector.extract_strided_slice %206 {offsets = [0, 32], sizes = [8, 32], strides = [1, 1]} : vector<8x96xf32> to vector<8x32xf32>
    %210 = arith.mulf %209, %170 : vector<8x32xf32>
    %211 = vector.extract_strided_slice %206 {offsets = [0, 0], sizes = [8, 32], strides = [1, 1]} : vector<8x96xf32> to vector<8x32xf32>
    %212 = arith.mulf %211, %208 : vector<8x32xf32>
    %213 = arith.addf %210, %212 : vector<8x32xf32>
    %214 = vector.extract_strided_slice %206 {offsets = [0, 64], sizes = [8, 32], strides = [1, 1]} : vector<8x96xf32> to vector<8x32xf32>
    %215 = math.tanh %213 : vector<8x32xf32>
    %216 = arith.mulf %214, %215 : vector<8x32xf32>
    %217 = vector.extract_strided_slice %39 {offsets = [32, 0], sizes = [8, 128], strides = [1, 1]} : vector<64x128xf32> to vector<8x128xf32>
    %cst_64 = arith.constant dense<0.000000e+00> : vector<8x128xf32>
    %218 = tpu.matmul %192, %40, %cst_64 {dimension_numbers = #tpu.dot_dimension_numbers<[1], [0], [0], [1], [0, 0, 1, 1], [], []>} : vector<8x32xf32>, vector<32x128xf32>, vector<8x128xf32> -> vector<8x128xf32>
    %219 = arith.addf %217, %218 : vector<8x128xf32>
    %220 = vector.extract_strided_slice %219 {offsets = [0, 0], sizes = [8, 96], strides = [1, 1]} : vector<8x128xf32> to vector<8x96xf32>
    %221 = arith.negf %220 : vector<8x96xf32>
    %222 = math.exp %221 : vector<8x96xf32>
    %cst_65 = arith.constant 1.000000e+00 : f32
    %223 = vector.broadcast %cst_65 : f32 to vector<8x96xf32>
    %224 = arith.addf %223, %222 : vector<8x96xf32>
    %225 = arith.divf %223, %224 : vector<8x96xf32>
    %226 = vector.extract_strided_slice %219 {offsets = [0, 96], sizes = [8, 32], strides = [1, 1]} : vector<8x128xf32> to vector<8x32xf32>
    %227 = math.tanh %226 : vector<8x32xf32>
    %228 = vector.extract_strided_slice %225 {offsets = [0, 32], sizes = [8, 32], strides = [1, 1]} : vector<8x96xf32> to vector<8x32xf32>
    %229 = arith.mulf %228, %189 : vector<8x32xf32>
    %230 = vector.extract_strided_slice %225 {offsets = [0, 0], sizes = [8, 32], strides = [1, 1]} : vector<8x96xf32> to vector<8x32xf32>
    %231 = arith.mulf %230, %227 : vector<8x32xf32>
    %232 = arith.addf %229, %231 : vector<8x32xf32>
    %233 = vector.extract_strided_slice %225 {offsets = [0, 64], sizes = [8, 32], strides = [1, 1]} : vector<8x96xf32> to vector<8x32xf32>
    %234 = math.tanh %232 : vector<8x32xf32>
    %235 = arith.mulf %233, %234 : vector<8x32xf32>
    %236 = tpu.concatenate %235, %216 in 1 : vector<8x32xf32>, vector<8x32xf32> -> vector<8x64xf32>
    %c0_66 = arith.constant 0 : index
    %c0_67 = arith.constant 0 : index
    %c0_68 = arith.constant 0 : index
    %237 = vector.load %arg9[%c0_66, %c0_67, %c0_68] : memref<1x64x128xf32, #tpu.memory_space<vmem>>, vector<1x64x128xf32>
    %238 = vector.shape_cast %237 : vector<1x64x128xf32> to vector<64x128xf32>
    %cst_69 = arith.constant dense<0.000000e+00> : vector<8x128xf32>
    %239 = tpu.matmul %236, %238, %cst_69 {dimension_numbers = #tpu.dot_dimension_numbers<[1], [0], [0], [1], [0, 0, 1, 1], [], []>} : vector<8x64xf32>, vector<64x128xf32>, vector<8x128xf32> -> vector<8x128xf32>
    %c0_70 = arith.constant 0 : index
    %c0_71 = arith.constant 0 : index
    %c0_72 = arith.constant 0 : index
    %240 = vector.load %arg10[%c0_70, %c0_71, %c0_72] : memref<1x1x128xf32, #tpu.memory_space<vmem>>, vector<1x1x128xf32>
    %241 = vector.shape_cast %240 : vector<1x1x128xf32> to vector<1x128xf32>
    %242 = vector.broadcast %241 : vector<1x128xf32> to vector<8x128xf32>
    %243 = arith.addf %239, %242 : vector<8x128xf32>
    %244 = vector.extract_strided_slice %243 {offsets = [0, 0], sizes = [8, 96], strides = [1, 1]} : vector<8x128xf32> to vector<8x96xf32>
    %245 = arith.negf %244 : vector<8x96xf32>
    %246 = math.exp %245 : vector<8x96xf32>
    %cst_73 = arith.constant 1.000000e+00 : f32
    %247 = vector.broadcast %cst_73 : f32 to vector<8x96xf32>
    %248 = arith.addf %247, %246 : vector<8x96xf32>
    %249 = arith.divf %247, %248 : vector<8x96xf32>
    %250 = vector.extract_strided_slice %243 {offsets = [0, 96], sizes = [8, 32], strides = [1, 1]} : vector<8x128xf32> to vector<8x32xf32>
    %251 = math.tanh %250 : vector<8x32xf32>
    %252 = vector.extract_strided_slice %249 {offsets = [0, 32], sizes = [8, 32], strides = [1, 1]} : vector<8x96xf32> to vector<8x32xf32>
    %253 = arith.mulf %252, %213 : vector<8x32xf32>
    %254 = vector.extract_strided_slice %249 {offsets = [0, 0], sizes = [8, 32], strides = [1, 1]} : vector<8x96xf32> to vector<8x32xf32>
    %255 = arith.mulf %254, %251 : vector<8x32xf32>
    %256 = arith.addf %253, %255 : vector<8x32xf32>
    %257 = vector.extract_strided_slice %249 {offsets = [0, 64], sizes = [8, 32], strides = [1, 1]} : vector<8x96xf32> to vector<8x32xf32>
    %258 = math.tanh %256 : vector<8x32xf32>
    %259 = arith.mulf %257, %258 : vector<8x32xf32>
    %260 = vector.extract_strided_slice %39 {offsets = [40, 0], sizes = [8, 128], strides = [1, 1]} : vector<64x128xf32> to vector<8x128xf32>
    %cst_74 = arith.constant dense<0.000000e+00> : vector<8x128xf32>
    %261 = tpu.matmul %235, %40, %cst_74 {dimension_numbers = #tpu.dot_dimension_numbers<[1], [0], [0], [1], [0, 0, 1, 1], [], []>} : vector<8x32xf32>, vector<32x128xf32>, vector<8x128xf32> -> vector<8x128xf32>
    %262 = arith.addf %260, %261 : vector<8x128xf32>
    %263 = vector.extract_strided_slice %262 {offsets = [0, 0], sizes = [8, 96], strides = [1, 1]} : vector<8x128xf32> to vector<8x96xf32>
    %264 = arith.negf %263 : vector<8x96xf32>
    %265 = math.exp %264 : vector<8x96xf32>
    %cst_75 = arith.constant 1.000000e+00 : f32
    %266 = vector.broadcast %cst_75 : f32 to vector<8x96xf32>
    %267 = arith.addf %266, %265 : vector<8x96xf32>
    %268 = arith.divf %266, %267 : vector<8x96xf32>
    %269 = vector.extract_strided_slice %262 {offsets = [0, 96], sizes = [8, 32], strides = [1, 1]} : vector<8x128xf32> to vector<8x32xf32>
    %270 = math.tanh %269 : vector<8x32xf32>
    %271 = vector.extract_strided_slice %268 {offsets = [0, 32], sizes = [8, 32], strides = [1, 1]} : vector<8x96xf32> to vector<8x32xf32>
    %272 = arith.mulf %271, %232 : vector<8x32xf32>
    %273 = vector.extract_strided_slice %268 {offsets = [0, 0], sizes = [8, 32], strides = [1, 1]} : vector<8x96xf32> to vector<8x32xf32>
    %274 = arith.mulf %273, %270 : vector<8x32xf32>
    %275 = arith.addf %272, %274 : vector<8x32xf32>
    %276 = vector.extract_strided_slice %268 {offsets = [0, 64], sizes = [8, 32], strides = [1, 1]} : vector<8x96xf32> to vector<8x32xf32>
    %277 = math.tanh %275 : vector<8x32xf32>
    %278 = arith.mulf %276, %277 : vector<8x32xf32>
    %279 = tpu.concatenate %278, %259 in 1 : vector<8x32xf32>, vector<8x32xf32> -> vector<8x64xf32>
    %c0_76 = arith.constant 0 : index
    %c0_77 = arith.constant 0 : index
    %c0_78 = arith.constant 0 : index
    %280 = vector.load %arg9[%c0_76, %c0_77, %c0_78] : memref<1x64x128xf32, #tpu.memory_space<vmem>>, vector<1x64x128xf32>
    %281 = vector.shape_cast %280 : vector<1x64x128xf32> to vector<64x128xf32>
    %cst_79 = arith.constant dense<0.000000e+00> : vector<8x128xf32>
    %282 = tpu.matmul %279, %281, %cst_79 {dimension_numbers = #tpu.dot_dimension_numbers<[1], [0], [0], [1], [0, 0, 1, 1], [], []>} : vector<8x64xf32>, vector<64x128xf32>, vector<8x128xf32> -> vector<8x128xf32>
    %c0_80 = arith.constant 0 : index
    %c0_81 = arith.constant 0 : index
    %c0_82 = arith.constant 0 : index
    %283 = vector.load %arg10[%c0_80, %c0_81, %c0_82] : memref<1x1x128xf32, #tpu.memory_space<vmem>>, vector<1x1x128xf32>
    %284 = vector.shape_cast %283 : vector<1x1x128xf32> to vector<1x128xf32>
    %285 = vector.broadcast %284 : vector<1x128xf32> to vector<8x128xf32>
    %286 = arith.addf %282, %285 : vector<8x128xf32>
    %287 = vector.extract_strided_slice %286 {offsets = [0, 0], sizes = [8, 96], strides = [1, 1]} : vector<8x128xf32> to vector<8x96xf32>
    %288 = arith.negf %287 : vector<8x96xf32>
    %289 = math.exp %288 : vector<8x96xf32>
    %cst_83 = arith.constant 1.000000e+00 : f32
    %290 = vector.broadcast %cst_83 : f32 to vector<8x96xf32>
    %291 = arith.addf %290, %289 : vector<8x96xf32>
    %292 = arith.divf %290, %291 : vector<8x96xf32>
    %293 = vector.extract_strided_slice %286 {offsets = [0, 96], sizes = [8, 32], strides = [1, 1]} : vector<8x128xf32> to vector<8x32xf32>
    %294 = math.tanh %293 : vector<8x32xf32>
    %295 = vector.extract_strided_slice %292 {offsets = [0, 32], sizes = [8, 32], strides = [1, 1]} : vector<8x96xf32> to vector<8x32xf32>
    %296 = arith.mulf %295, %256 : vector<8x32xf32>
    %297 = vector.extract_strided_slice %292 {offsets = [0, 0], sizes = [8, 32], strides = [1, 1]} : vector<8x96xf32> to vector<8x32xf32>
    %298 = arith.mulf %297, %294 : vector<8x32xf32>
    %299 = arith.addf %296, %298 : vector<8x32xf32>
    %300 = vector.extract_strided_slice %292 {offsets = [0, 64], sizes = [8, 32], strides = [1, 1]} : vector<8x96xf32> to vector<8x32xf32>
    %301 = math.tanh %299 : vector<8x32xf32>
    %302 = arith.mulf %300, %301 : vector<8x32xf32>
    %303 = vector.extract_strided_slice %39 {offsets = [48, 0], sizes = [8, 128], strides = [1, 1]} : vector<64x128xf32> to vector<8x128xf32>
    %cst_84 = arith.constant dense<0.000000e+00> : vector<8x128xf32>
    %304 = tpu.matmul %278, %40, %cst_84 {dimension_numbers = #tpu.dot_dimension_numbers<[1], [0], [0], [1], [0, 0, 1, 1], [], []>} : vector<8x32xf32>, vector<32x128xf32>, vector<8x128xf32> -> vector<8x128xf32>
    %305 = arith.addf %303, %304 : vector<8x128xf32>
    %306 = vector.extract_strided_slice %305 {offsets = [0, 0], sizes = [8, 96], strides = [1, 1]} : vector<8x128xf32> to vector<8x96xf32>
    %307 = arith.negf %306 : vector<8x96xf32>
    %308 = math.exp %307 : vector<8x96xf32>
    %cst_85 = arith.constant 1.000000e+00 : f32
    %309 = vector.broadcast %cst_85 : f32 to vector<8x96xf32>
    %310 = arith.addf %309, %308 : vector<8x96xf32>
    %311 = arith.divf %309, %310 : vector<8x96xf32>
    %312 = vector.extract_strided_slice %305 {offsets = [0, 96], sizes = [8, 32], strides = [1, 1]} : vector<8x128xf32> to vector<8x32xf32>
    %313 = math.tanh %312 : vector<8x32xf32>
    %314 = vector.extract_strided_slice %311 {offsets = [0, 32], sizes = [8, 32], strides = [1, 1]} : vector<8x96xf32> to vector<8x32xf32>
    %315 = arith.mulf %314, %275 : vector<8x32xf32>
    %316 = vector.extract_strided_slice %311 {offsets = [0, 0], sizes = [8, 32], strides = [1, 1]} : vector<8x96xf32> to vector<8x32xf32>
    %317 = arith.mulf %316, %313 : vector<8x32xf32>
    %318 = arith.addf %315, %317 : vector<8x32xf32>
    %319 = vector.extract_strided_slice %311 {offsets = [0, 64], sizes = [8, 32], strides = [1, 1]} : vector<8x96xf32> to vector<8x32xf32>
    %320 = math.tanh %318 : vector<8x32xf32>
    %321 = arith.mulf %319, %320 : vector<8x32xf32>
    %322 = tpu.concatenate %321, %302 in 1 : vector<8x32xf32>, vector<8x32xf32> -> vector<8x64xf32>
    %c0_86 = arith.constant 0 : index
    %c0_87 = arith.constant 0 : index
    %c0_88 = arith.constant 0 : index
    %323 = vector.load %arg9[%c0_86, %c0_87, %c0_88] : memref<1x64x128xf32, #tpu.memory_space<vmem>>, vector<1x64x128xf32>
    %324 = vector.shape_cast %323 : vector<1x64x128xf32> to vector<64x128xf32>
    %cst_89 = arith.constant dense<0.000000e+00> : vector<8x128xf32>
    %325 = tpu.matmul %322, %324, %cst_89 {dimension_numbers = #tpu.dot_dimension_numbers<[1], [0], [0], [1], [0, 0, 1, 1], [], []>} : vector<8x64xf32>, vector<64x128xf32>, vector<8x128xf32> -> vector<8x128xf32>
    %c0_90 = arith.constant 0 : index
    %c0_91 = arith.constant 0 : index
    %c0_92 = arith.constant 0 : index
    %326 = vector.load %arg10[%c0_90, %c0_91, %c0_92] : memref<1x1x128xf32, #tpu.memory_space<vmem>>, vector<1x1x128xf32>
    %327 = vector.shape_cast %326 : vector<1x1x128xf32> to vector<1x128xf32>
    %328 = vector.broadcast %327 : vector<1x128xf32> to vector<8x128xf32>
    %329 = arith.addf %325, %328 : vector<8x128xf32>
    %330 = vector.extract_strided_slice %329 {offsets = [0, 0], sizes = [8, 96], strides = [1, 1]} : vector<8x128xf32> to vector<8x96xf32>
    %331 = arith.negf %330 : vector<8x96xf32>
    %332 = math.exp %331 : vector<8x96xf32>
    %cst_93 = arith.constant 1.000000e+00 : f32
    %333 = vector.broadcast %cst_93 : f32 to vector<8x96xf32>
    %334 = arith.addf %333, %332 : vector<8x96xf32>
    %335 = arith.divf %333, %334 : vector<8x96xf32>
    %336 = vector.extract_strided_slice %329 {offsets = [0, 96], sizes = [8, 32], strides = [1, 1]} : vector<8x128xf32> to vector<8x32xf32>
    %337 = math.tanh %336 : vector<8x32xf32>
    %338 = vector.extract_strided_slice %335 {offsets = [0, 32], sizes = [8, 32], strides = [1, 1]} : vector<8x96xf32> to vector<8x32xf32>
    %339 = arith.mulf %338, %299 : vector<8x32xf32>
    %340 = vector.extract_strided_slice %335 {offsets = [0, 0], sizes = [8, 32], strides = [1, 1]} : vector<8x96xf32> to vector<8x32xf32>
    %341 = arith.mulf %340, %337 : vector<8x32xf32>
    %342 = arith.addf %339, %341 : vector<8x32xf32>
    %343 = vector.extract_strided_slice %335 {offsets = [0, 64], sizes = [8, 32], strides = [1, 1]} : vector<8x96xf32> to vector<8x32xf32>
    %344 = math.tanh %342 : vector<8x32xf32>
    %345 = arith.mulf %343, %344 : vector<8x32xf32>
    %346 = vector.extract_strided_slice %39 {offsets = [56, 0], sizes = [8, 128], strides = [1, 1]} : vector<64x128xf32> to vector<8x128xf32>
    %cst_94 = arith.constant dense<0.000000e+00> : vector<8x128xf32>
    %347 = tpu.matmul %321, %40, %cst_94 {dimension_numbers = #tpu.dot_dimension_numbers<[1], [0], [0], [1], [0, 0, 1, 1], [], []>} : vector<8x32xf32>, vector<32x128xf32>, vector<8x128xf32> -> vector<8x128xf32>
    %348 = arith.addf %346, %347 : vector<8x128xf32>
    %349 = vector.extract_strided_slice %348 {offsets = [0, 0], sizes = [8, 96], strides = [1, 1]} : vector<8x128xf32> to vector<8x96xf32>
    %350 = arith.negf %349 : vector<8x96xf32>
    %351 = math.exp %350 : vector<8x96xf32>
    %cst_95 = arith.constant 1.000000e+00 : f32
    %352 = vector.broadcast %cst_95 : f32 to vector<8x96xf32>
    %353 = arith.addf %352, %351 : vector<8x96xf32>
    %354 = arith.divf %352, %353 : vector<8x96xf32>
    %355 = vector.extract_strided_slice %348 {offsets = [0, 96], sizes = [8, 32], strides = [1, 1]} : vector<8x128xf32> to vector<8x32xf32>
    %356 = math.tanh %355 : vector<8x32xf32>
    %357 = vector.extract_strided_slice %354 {offsets = [0, 32], sizes = [8, 32], strides = [1, 1]} : vector<8x96xf32> to vector<8x32xf32>
    %358 = arith.mulf %357, %318 : vector<8x32xf32>
    %359 = vector.extract_strided_slice %354 {offsets = [0, 0], sizes = [8, 32], strides = [1, 1]} : vector<8x96xf32> to vector<8x32xf32>
    %360 = arith.mulf %359, %356 : vector<8x32xf32>
    %361 = arith.addf %358, %360 : vector<8x32xf32>
    %362 = vector.extract_strided_slice %354 {offsets = [0, 64], sizes = [8, 32], strides = [1, 1]} : vector<8x96xf32> to vector<8x32xf32>
    %363 = math.tanh %361 : vector<8x32xf32>
    %364 = arith.mulf %362, %363 : vector<8x32xf32>
    %365 = tpu.concatenate %364, %345 in 1 : vector<8x32xf32>, vector<8x32xf32> -> vector<8x64xf32>
    %c0_96 = arith.constant 0 : index
    %c0_97 = arith.constant 0 : index
    %c0_98 = arith.constant 0 : index
    %366 = vector.load %arg9[%c0_96, %c0_97, %c0_98] : memref<1x64x128xf32, #tpu.memory_space<vmem>>, vector<1x64x128xf32>
    %367 = vector.shape_cast %366 : vector<1x64x128xf32> to vector<64x128xf32>
    %cst_99 = arith.constant dense<0.000000e+00> : vector<8x128xf32>
    %368 = tpu.matmul %365, %367, %cst_99 {dimension_numbers = #tpu.dot_dimension_numbers<[1], [0], [0], [1], [0, 0, 1, 1], [], []>} : vector<8x64xf32>, vector<64x128xf32>, vector<8x128xf32> -> vector<8x128xf32>
    %c0_100 = arith.constant 0 : index
    %c0_101 = arith.constant 0 : index
    %c0_102 = arith.constant 0 : index
    %369 = vector.load %arg10[%c0_100, %c0_101, %c0_102] : memref<1x1x128xf32, #tpu.memory_space<vmem>>, vector<1x1x128xf32>
    %370 = vector.shape_cast %369 : vector<1x1x128xf32> to vector<1x128xf32>
    %371 = vector.broadcast %370 : vector<1x128xf32> to vector<8x128xf32>
    %372 = arith.addf %368, %371 : vector<8x128xf32>
    %373 = vector.extract_strided_slice %372 {offsets = [0, 0], sizes = [8, 96], strides = [1, 1]} : vector<8x128xf32> to vector<8x96xf32>
    %374 = arith.negf %373 : vector<8x96xf32>
    %375 = math.exp %374 : vector<8x96xf32>
    %cst_103 = arith.constant 1.000000e+00 : f32
    %376 = vector.broadcast %cst_103 : f32 to vector<8x96xf32>
    %377 = arith.addf %376, %375 : vector<8x96xf32>
    %378 = arith.divf %376, %377 : vector<8x96xf32>
    %379 = vector.extract_strided_slice %372 {offsets = [0, 96], sizes = [8, 32], strides = [1, 1]} : vector<8x128xf32> to vector<8x32xf32>
    %380 = math.tanh %379 : vector<8x32xf32>
    %381 = vector.extract_strided_slice %378 {offsets = [0, 32], sizes = [8, 32], strides = [1, 1]} : vector<8x96xf32> to vector<8x32xf32>
    %382 = arith.mulf %381, %342 : vector<8x32xf32>
    %383 = vector.extract_strided_slice %378 {offsets = [0, 0], sizes = [8, 32], strides = [1, 1]} : vector<8x96xf32> to vector<8x32xf32>
    %384 = arith.mulf %383, %380 : vector<8x32xf32>
    %385 = arith.addf %382, %384 : vector<8x32xf32>
    %386 = vector.extract_strided_slice %378 {offsets = [0, 64], sizes = [8, 32], strides = [1, 1]} : vector<8x96xf32> to vector<8x32xf32>
    %387 = math.tanh %385 : vector<8x32xf32>
    %388 = arith.mulf %386, %387 : vector<8x32xf32>
    %389 = tpu.concatenate %87, %130, %173, %216, %259, %302, %345, %388 in 0 : vector<8x32xf32>, vector<8x32xf32>, vector<8x32xf32>, vector<8x32xf32>, vector<8x32xf32>, vector<8x32xf32>, vector<8x32xf32>, vector<8x32xf32> -> vector<64x32xf32>
    %c0_104 = arith.constant 0 : index
    %c0_105 = arith.constant 0 : index
    %390 = vector.load %arg11[%c0_104, %c0_105] : memref<32x32xf32, #tpu.memory_space<vmem>>, vector<32x32xf32>
    %cst_106 = arith.constant dense<0.000000e+00> : vector<64x32xf32>
    %391 = tpu.matmul %389, %390, %cst_106 {dimension_numbers = #tpu.dot_dimension_numbers<[1], [0], [0], [1], [0, 0, 1, 1], [], []>} : vector<64x32xf32>, vector<32x32xf32>, vector<64x32xf32> -> vector<64x32xf32>
    %c0_107 = arith.constant 0 : index
    %c0_108 = arith.constant 0 : index
    %392 = vector.load %arg12[%c0_107, %c0_108] : memref<1x32xf32, #tpu.memory_space<vmem>>, vector<1x32xf32>
    %393 = vector.broadcast %392 : vector<1x32xf32> to vector<64x32xf32>
    %394 = arith.addf %391, %393 : vector<64x32xf32>
    %cst_109 = arith.constant 0.000000e+00 : f32
    %395 = vector.broadcast %cst_109 : f32 to vector<64x32xf32>
    %396 = arith.cmpf ogt, %394, %395 : vector<64x32xf32>
    %397 = vector.broadcast %0 : f32 to vector<64x32xf32>
    %398 = arith.mulf %397, %394 : vector<64x32xf32>
    %399 = arith.select %396, %394, %398 : vector<64x32xi1>, vector<64x32xf32>
    %c0_110 = arith.constant 0 : index
    %c0_111 = arith.constant 0 : index
    %400 = vector.load %arg13[%c0_110, %c0_111] : memref<32x32xf32, #tpu.memory_space<vmem>>, vector<32x32xf32>
    %cst_112 = arith.constant dense<0.000000e+00> : vector<64x32xf32>
    %401 = tpu.matmul %399, %400, %cst_112 {dimension_numbers = #tpu.dot_dimension_numbers<[1], [0], [0], [1], [0, 0, 1, 1], [], []>} : vector<64x32xf32>, vector<32x32xf32>, vector<64x32xf32> -> vector<64x32xf32>
    %c0_113 = arith.constant 0 : index
    %c0_114 = arith.constant 0 : index
    %402 = vector.load %arg14[%c0_113, %c0_114] : memref<1x32xf32, #tpu.memory_space<vmem>>, vector<1x32xf32>
    %403 = vector.broadcast %402 : vector<1x32xf32> to vector<64x32xf32>
    %404 = arith.addf %401, %403 : vector<64x32xf32>
    %cst_115 = arith.constant 0.000000e+00 : f32
    %405 = vector.broadcast %cst_115 : f32 to vector<64x32xf32>
    %406 = arith.cmpf ogt, %404, %405 : vector<64x32xf32>
    %407 = vector.broadcast %0 : f32 to vector<64x32xf32>
    %408 = arith.mulf %407, %404 : vector<64x32xf32>
    %409 = arith.select %406, %404, %408 : vector<64x32xi1>, vector<64x32xf32>
    %c0_116 = arith.constant 0 : index
    %c0_117 = arith.constant 0 : index
    %410 = vector.load %arg15[%c0_116, %c0_117] : memref<32x32xf32, #tpu.memory_space<vmem>>, vector<32x32xf32>
    %cst_118 = arith.constant dense<0.000000e+00> : vector<64x32xf32>
    %411 = tpu.matmul %409, %410, %cst_118 {dimension_numbers = #tpu.dot_dimension_numbers<[1], [0], [0], [1], [0, 0, 1, 1], [], []>} : vector<64x32xf32>, vector<32x32xf32>, vector<64x32xf32> -> vector<64x32xf32>
    %c0_119 = arith.constant 0 : index
    %c0_120 = arith.constant 0 : index
    %412 = vector.load %arg16[%c0_119, %c0_120] : memref<1x32xf32, #tpu.memory_space<vmem>>, vector<1x32xf32>
    %413 = vector.broadcast %412 : vector<1x32xf32> to vector<64x32xf32>
    %414 = arith.addf %411, %413 : vector<64x32xf32>
    %cst_121 = arith.constant 0.000000e+00 : f32
    %415 = vector.broadcast %cst_121 : f32 to vector<64x32xf32>
    %416 = arith.cmpf ogt, %414, %415 : vector<64x32xf32>
    %417 = vector.broadcast %0 : f32 to vector<64x32xf32>
    %418 = arith.mulf %417, %414 : vector<64x32xf32>
    %419 = arith.select %416, %414, %418 : vector<64x32xi1>, vector<64x32xf32>
    %c0_122 = arith.constant 0 : index
    %c0_123 = arith.constant 0 : index
    %420 = vector.load %arg17[%c0_122, %c0_123] : memref<32x2xf32, #tpu.memory_space<vmem>>, vector<32x2xf32>
    %cst_124 = arith.constant dense<0.000000e+00> : vector<64x2xf32>
    %421 = tpu.matmul %419, %420, %cst_124 {dimension_numbers = #tpu.dot_dimension_numbers<[1], [0], [0], [1], [0, 0, 1, 1], [], []>} : vector<64x32xf32>, vector<32x2xf32>, vector<64x2xf32> -> vector<64x2xf32>
    %c0_125 = arith.constant 0 : index
    %c0_126 = arith.constant 0 : index
    %422 = vector.load %arg18[%c0_125, %c0_126] : memref<1x2xf32, #tpu.memory_space<vmem>>, vector<1x2xf32>
    %423 = vector.broadcast %422 : vector<1x2xf32> to vector<64x2xf32>
    %424 = arith.addf %421, %423 : vector<64x2xf32>
    %425 = vector.extract_strided_slice %424 {offsets = [0, 0], sizes = [2, 2], strides = [1, 1]} : vector<64x2xf32> to vector<2x2xf32>
    %426 = vector.extract_strided_slice %424 {offsets = [8, 0], sizes = [2, 2], strides = [1, 1]} : vector<64x2xf32> to vector<2x2xf32>
    %427 = vector.extract_strided_slice %424 {offsets = [16, 0], sizes = [2, 2], strides = [1, 1]} : vector<64x2xf32> to vector<2x2xf32>
    %428 = vector.extract_strided_slice %424 {offsets = [24, 0], sizes = [2, 2], strides = [1, 1]} : vector<64x2xf32> to vector<2x2xf32>
    %429 = vector.extract_strided_slice %424 {offsets = [32, 0], sizes = [2, 2], strides = [1, 1]} : vector<64x2xf32> to vector<2x2xf32>
    %430 = vector.extract_strided_slice %424 {offsets = [40, 0], sizes = [2, 2], strides = [1, 1]} : vector<64x2xf32> to vector<2x2xf32>
    %431 = vector.extract_strided_slice %424 {offsets = [48, 0], sizes = [2, 2], strides = [1, 1]} : vector<64x2xf32> to vector<2x2xf32>
    %432 = vector.extract_strided_slice %424 {offsets = [56, 0], sizes = [2, 2], strides = [1, 1]} : vector<64x2xf32> to vector<2x2xf32>
    %433 = tpu.concatenate %425, %426, %427, %428, %429, %430, %431, %432 in 1 : vector<2x2xf32>, vector<2x2xf32>, vector<2x2xf32>, vector<2x2xf32>, vector<2x2xf32>, vector<2x2xf32>, vector<2x2xf32>, vector<2x2xf32> -> vector<2x16xf32>
    %c0_127 = arith.constant 0 : index
    %c0_128 = arith.constant 0 : index
    %434 = vector.load %arg19[%c0_127, %c0_128] : memref<2x16xf32, #tpu.memory_space<vmem>>, vector<2x16xf32>
    tpu.vector_store %arg19[%c0_127, %c0_128], %433 {strides = array<i32>} : memref<2x16xf32, #tpu.memory_space<vmem>>, vector<2x16xf32>,
    return
  }
}

</mosaic_0001>

<llo_original>
// kernel: traj_generator_forward.1
$region0: #{traj_generator_forward.1}
  #allocation0 [shape = 'u32[]', space=smem, size = 0x4, offset = 0x4, fixed_abs, tag = 'smem constant byte address 0x4 - core index']
  #allocation1 [shape = 'u32[72,128]{1,0:T(1,128)}', space=vmem, size = 0x9000, scoped, tag = 'internal scratch']
  #allocation2 [shape = 'f32[1,1]{1,0:T(1,128)S(6)}', space=smem, size = 0x200, scoped, tag = 'scoped memory for traj_generator_forward.1']
  %s0 = inlined_call_operand.<no memory space> [shape: f32[1,1], index: 0, kind: input, shape index: {}]
  %s1 = inlined_call_operand.vmem [shape: f32[2,3], index: 1, kind: input, shape index: {}]
  %s2 = inlined_call_operand.vmem [shape: f32[2,4], index: 2, kind: input, shape index: {}]
  %s3 = inlined_call_operand.vmem [shape: f32[2,2], index: 3, kind: input, shape index: {}]
  %s4 = inlined_call_operand.hbm [shape: f32[14,112], index: 4, kind: input, shape index: {}]
  %s5 = inlined_call_operand.hbm [shape: f32[1,112], index: 5, kind: input, shape index: {}]
  %s6 = inlined_call_operand.hbm [shape: f32[14,128], index: 6, kind: input, shape index: {}]
  %s7 = inlined_call_operand.hbm [shape: f32[1,128], index: 7, kind: input, shape index: {}]
  %s8 = inlined_call_operand.vmem [shape: f32[32,128], index: 8, kind: input, shape index: {}]
  %s9 = inlined_call_operand.hbm [shape: f32[1,64,128], index: 9, kind: input, shape index: {}]
  %s10 = inlined_call_operand.hbm [shape: f32[1,1,128], index: 10, kind: input, shape index: {}]
  %s11 = inlined_call_operand.hbm [shape: f32[32,32], index: 11, kind: input, shape index: {}]
  %s12 = inlined_call_operand.hbm [shape: f32[1,32], index: 12, kind: input, shape index: {}]
  %s13 = inlined_call_operand.hbm [shape: f32[32,32], index: 13, kind: input, shape index: {}]
  %s14 = inlined_call_operand.vmem [shape: f32[1,32], index: 14, kind: input, shape index: {}]
  %s15 = inlined_call_operand.hbm [shape: f32[32,32], index: 15, kind: input, shape index: {}]
  %s16 = inlined_call_operand.vmem [shape: f32[1,32], index: 16, kind: input, shape index: {}]
  %s17 = inlined_call_operand.vmem [shape: f32[32,2], index: 17, kind: input, shape index: {}]
  %s18 = inlined_call_operand.vmem [shape: f32[1,2], index: 18, kind: input, shape index: {}]
  %s19 = inlined_call_operand.vmem [shape: f32[2,16], index: 19, kind: output, shape index: {}]
  %s20 = sld [smem:[#allocation0]]
  $region126: #{traj_generator_forward.1} parent=0
    _
  %s22 = ssub.s32 1, %s20
  %s23 = scalar_select 0, %s22, %s20
  %24 = sst [smem:[#allocation2]] %s0
  $region1: #{traj_generator_forward.1} parent=0
    #allocation3 [shape = 'u8[8192]{0}', space=vmem, size = 0x2000, scoped, tag = 'input window, operand 4, single buffered']
    #allocation4 [shape = 's32[1]{0}', space=sflag, size = 0x4, scoped, tag = 'scoped memory for traj_generator_forward.1']
    #allocation5 [shape = 'u8[512]{0}', space=vmem, size = 0x400, scoped, tag = 'input window, operand 5, single buffered']
    #allocation6 [shape = 's32[1]{0}', space=sflag, size = 0x4, scoped, tag = 'scoped memory for traj_generator_forward.1']
    #allocation7 [shape = 'u8[8192]{0}', space=vmem, size = 0x2000, scoped, tag = 'input window, operand 6, single buffered']
    #allocation8 [shape = 'u8[512]{0}', space=vmem, size = 0x400, scoped, tag = 'input window, operand 7, single buffered']
    #allocation9 [shape = 's32[1]{0}', space=sflag, size = 0x4, scoped, tag = 'scoped memory for traj_generator_forward.1']
    #allocation10 [shape = 'u8[32768]{0}', space=vmem, size = 0x8000, scoped, tag = 'input window, operand 9, single buffered']
    #allocation11 [shape = 'u8[512]{0}', space=vmem, size = 0x400, scoped, tag = 'input window, operand 10, single buffered']
    #allocation12 [shape = 's32[1]{0}', space=sflag, size = 0x4, scoped, tag = 'scoped memory for traj_generator_forward.1']
    #allocation13 [shape = 'u8[16384]{0}', space=vmem, size = 0x4000, scoped, tag = 'input window, operand 11, single buffered']
    #allocation14 [shape = 'u8[512]{0}', space=vmem, size = 0x400, scoped, tag = 'input window, operand 12, single buffered']
    #allocation15 [shape = 's32[1]{0}', space=sflag, size = 0x4, scoped, tag = 'scoped memory for traj_generator_forward.1']
    #allocation16 [shape = 'u8[16384]{0}', space=vmem, size = 0x4000, scoped, tag = 'input window, operand 13, single buffered']
    #allocation17 [shape = 'u8[16384]{0}', space=vmem, size = 0x4000, scoped, tag = 'input window, operand 15, single buffered']
    #allocation18 [shape = 's32[1]{0}', space=sflag, size = 0x4, scoped, tag = 'scoped memory for traj_generator_forward.1']
    %25 = vsyncpa [#allocation4], 0
    %26 = vsyncpa [#allocation6], 0
    %27 = vsyncpa [#allocation9], 0
    %28 = vsyncpa [#allocation12], 0
    %29 = vsyncpa [#allocation15], 0
    %30 = vsyncpa [#allocation18], 0
    // Predicated region
    $region2: #{traj_generator_forward.1} parent=1 // pred_check
      _
    $region3: #{traj_generator_forward.1} parent=1 // pred_check_branch
      %32 = sbr.rel (0) target = $region5
    $region4: #{traj_generator_forward.1} parent=1 // pred_region
      _
    $region5: #{traj_generator_forward.1} parent=1 // pred_fallthru
      _
    // Predicated region
    $region6: #{traj_generator_forward.1} parent=1 // pred_check
      _
    $region7: #{traj_generator_forward.1} parent=1 // pred_check_branch
      %34 = sbr.rel (0) target = $region9
    $region8: #{traj_generator_forward.1} parent=1 // pred_region
      _
    $region9: #{traj_generator_forward.1} parent=1 // pred_fallthru
      _
    // Predicated region
    $region10: #{traj_generator_forward.1} parent=1 // pred_check
      _
    $region11: #{traj_generator_forward.1} parent=1 // pred_check_branch
      %36 = sbr.rel (0) target = $region13
    $region12: #{traj_generator_forward.1} parent=1 // pred_region
      _
    $region13: #{traj_generator_forward.1} parent=1 // pred_fallthru
      _
    // Predicated region
    $region14: #{traj_generator_forward.1} parent=1 // pred_check
      _
    $region15: #{traj_generator_forward.1} parent=1 // pred_check_branch
      %38 = sbr.rel (0) target = $region17
    $region16: #{traj_generator_forward.1} parent=1 // pred_region
      _
    $region17: #{traj_generator_forward.1} parent=1 // pred_fallthru
      _
    // Predicated region
    $region18: #{traj_generator_forward.1} parent=1 // pred_check
      _
    $region19: #{traj_generator_forward.1} parent=1 // pred_check_branch
      %40 = sbr.rel (0) target = $region21
    $region20: #{traj_generator_forward.1} parent=1 // pred_region
      %42 = vsyncadd [#allocation4], 0
      %s43 = sshll.u32 %s4, 4
      %s44 = int_to_ptr.hbm [resolvable:$true] %s43
      %s45 = sshll.u32 [#allocation3], 4
      %s46 = int_to_ptr.vmem [resolvable:$true] %s45
      %51 = dma.hbm_to_vmem [thread:$0]  %s44, 256, %s46, [#allocation4], 128, 128, 8
    $region21: #{traj_generator_forward.1} parent=1 // pred_fallthru
      _
    // Predicated region
    $region22: #{traj_generator_forward.1} parent=1 // pred_check
      _
    $region23: #{traj_generator_forward.1} parent=1 // pred_check_branch
      %53 = sbr.rel (0) target = $region25
    $region24: #{traj_generator_forward.1} parent=1 // pred_region
      %55 = vsyncadd [#allocation6], 0
      %s57 = sshll.u32 %s5, 4
      %s58 = int_to_ptr.hbm [resolvable:$true] %s57
      %s59 = sshll.u32 [#allocation5], 4
      %s60 = int_to_ptr.vmem [resolvable:$true] %s59
      %62 = dma.hbm_to_vmem [thread:$0]  %s58, 16, %s60, [#allocation6]
    $region25: #{traj_generator_forward.1} parent=1 // pred_fallthru
      _
    // Predicated region
    $region26: #{traj_generator_forward.1} parent=1 // pred_check
      _
    $region27: #{traj_generator_forward.1} parent=1 // pred_check_branch
      %64 = sbr.rel (0) target = $region29
    $region28: #{traj_generator_forward.1} parent=1 // pred_region
      %66 = vsyncadd [#allocation6], 0
      %s67 = sshll.u32 %s6, 4
      %s68 = int_to_ptr.hbm [resolvable:$true] %s67
      %s69 = sshll.u32 [#allocation7], 4
      %s70 = int_to_ptr.vmem [resolvable:$true] %s69
      %75 = dma.hbm_to_vmem [thread:$0]  %s68, 256, %s70, [#allocation6], 128, 128, 8
    $region29: #{traj_generator_forward.1} parent=1 // pred_fallthru
      _
    // Predicated region
    $region30: #{traj_generator_forward.1} parent=1 // pred_check
      _
    $region31: #{traj_generator_forward.1} parent=1 // pred_check_branch
      %77 = sbr.rel (0) target = $region33
    $region32: #{traj_generator_forward.1} parent=1 // pred_region
      %79 = vsyncadd [#allocation9], 0
      %s81 = sshll.u32 %s7, 4
      %s82 = int_to_ptr.hbm [resolvable:$true] %s81
      %s83 = sshll.u32 [#allocation8], 4
      %s84 = int_to_ptr.vmem [resolvable:$true] %s83
      %86 = dma.hbm_to_vmem [thread:$0]  %s82, 16, %s84, [#allocation9]
    $region33: #{traj_generator_forward.1} parent=1 // pred_fallthru
      _
    // Predicated region
    $region34: #{traj_generator_forward.1} parent=1 // pred_check
      _
    $region35: #{traj_generator_forward.1} parent=1 // pred_check_branch
      %88 = sbr.rel (0) target = $region37
    $region36: #{traj_generator_forward.1} parent=1 // pred_region
      _
    $region37: #{traj_generator_forward.1} parent=1 // pred_fallthru
      _
    // Predicated region
    $region38: #{traj_generator_forward.1} parent=1 // pred_check
      _
    $region39: #{traj_generator_forward.1} parent=1 // pred_check_branch
      %90 = sbr.rel (0) target = $region41
    $region40: #{traj_generator_forward.1} parent=1 // pred_region
      %92 = vsyncadd [#allocation9], 0
      %s93 = sshll.u32 %s9, 4
      %s94 = int_to_ptr.hbm [resolvable:$true] %s93
      %s95 = sshll.u32 [#allocation10], 4
      %s96 = int_to_ptr.vmem [resolvable:$true] %s95
      %101 = dma.hbm_to_vmem [thread:$0]  %s94, 1024, %s96, [#allocation9], 128, 128, 8
    $region41: #{traj_generator_forward.1} parent=1 // pred_fallthru
      _
    // Predicated region
    $region42: #{traj_generator_forward.1} parent=1 // pred_check
      _
    $region43: #{traj_generator_forward.1} parent=1 // pred_check_branch
      %103 = sbr.rel (0) target = $region45
    $region44: #{traj_generator_forward.1} parent=1 // pred_region
      %105 = vsyncadd [#allocation12], 0
      %s107 = sshll.u32 %s10, 4
      %s108 = int_to_ptr.hbm [resolvable:$true] %s107
      %s109 = sshll.u32 [#allocation11], 4
      %s110 = int_to_ptr.vmem [resolvable:$true] %s109
      %112 = dma.hbm_to_vmem [thread:$0]  %s108, 16, %s110, [#allocation12]
    $region45: #{traj_generator_forward.1} parent=1 // pred_fallthru
      _
    // Predicated region
    $region46: #{traj_generator_forward.1} parent=1 // pred_check
      _
    $region47: #{traj_generator_forward.1} parent=1 // pred_check_branch
      %114 = sbr.rel (0) target = $region49
    $region48: #{traj_generator_forward.1} parent=1 // pred_region
      %116 = vsyncadd [#allocation12], 0
      %s117 = sshll.u32 %s11, 4
      %s118 = int_to_ptr.hbm [resolvable:$true] %s117
      %s119 = sshll.u32 [#allocation13], 4
      %s120 = int_to_ptr.vmem [resolvable:$true] %s119
      %125 = dma.hbm_to_vmem [thread:$0]  %s118, 512, %s120, [#allocation12], 128, 128, 8
    $region49: #{traj_generator_forward.1} parent=1 // pred_fallthru
      _
    // Predicated region
    $region50: #{traj_generator_forward.1} parent=1 // pred_check
      _
    $region51: #{traj_generator_forward.1} parent=1 // pred_check_branch
      %127 = sbr.rel (0) target = $region53
    $region52: #{traj_generator_forward.1} parent=1 // pred_region
      %129 = vsyncadd [#allocation15], 0
      %s131 = sshll.u32 %s12, 4
      %s132 = int_to_ptr.hbm [resolvable:$true] %s131
      %s133 = sshll.u32 [#allocation14], 4
      %s134 = int_to_ptr.vmem [resolvable:$true] %s133
      %136 = dma.hbm_to_vmem [thread:$0]  %s132, 16, %s134, [#allocation15]
    $region53: #{traj_generator_forward.1} parent=1 // pred_fallthru
      _
    // Predicated region
    $region54: #{traj_generator_forward.1} parent=1 // pred_check
      _
    $region55: #{traj_generator_forward.1} parent=1 // pred_check_branch
      %138 = sbr.rel (0) target = $region57
    $region56: #{traj_generator_forward.1} parent=1 // pred_region
      %140 = vsyncadd [#allocation15], 0
      %s141 = sshll.u32 %s13, 4
      %s142 = int_to_ptr.hbm [resolvable:$true] %s141
      %s143 = sshll.u32 [#allocation16], 4
      %s144 = int_to_ptr.vmem [resolvable:$true] %s143
      %149 = dma.hbm_to_vmem [thread:$0]  %s142, 512, %s144, [#allocation15], 128, 128, 8
    $region57: #{traj_generator_forward.1} parent=1 // pred_fallthru
      _
    // Predicated region
    $region58: #{traj_generator_forward.1} parent=1 // pred_check
      _
    $region59: #{traj_generator_forward.1} parent=1 // pred_check_branch
      %151 = sbr.rel (0) target = $region61
    $region60: #{traj_generator_forward.1} parent=1 // pred_region
      _
    $region61: #{traj_generator_forward.1} parent=1 // pred_fallthru
      _
    // Predicated region
    $region62: #{traj_generator_forward.1} parent=1 // pred_check
      _
    $region63: #{traj_generator_forward.1} parent=1 // pred_check_branch
      %153 = sbr.rel (0) target = $region65
    $region64: #{traj_generator_forward.1} parent=1 // pred_region
      %155 = vsyncadd [#allocation18], 0
      %s156 = sshll.u32 %s15, 4
      %s157 = int_to_ptr.hbm [resolvable:$true] %s156
      %s158 = sshll.u32 [#allocation17], 4
      %s159 = int_to_ptr.vmem [resolvable:$true] %s158
      %164 = dma.hbm_to_vmem [thread:$0]  %s157, 512, %s159, [#allocation18], 128, 128, 8
    $region65: #{traj_generator_forward.1} parent=1 // pred_fallthru
      _
    // Predicated region
    $region66: #{traj_generator_forward.1} parent=1 // pred_check
      _
    $region67: #{traj_generator_forward.1} parent=1 // pred_check_branch
      %166 = sbr.rel (0) target = $region69
    $region68: #{traj_generator_forward.1} parent=1 // pred_region
      _
    $region69: #{traj_generator_forward.1} parent=1 // pred_fallthru
      _
    // Predicated region
    $region70: #{traj_generator_forward.1} parent=1 // pred_check
      _
    $region71: #{traj_generator_forward.1} parent=1 // pred_check_branch
      %168 = sbr.rel (0) target = $region73
    $region72: #{traj_generator_forward.1} parent=1 // pred_region
      _
    $region73: #{traj_generator_forward.1} parent=1 // pred_fallthru
      _
    // Predicated region
    $region74: #{traj_generator_forward.1} parent=1 // pred_check
      _
    $region75: #{traj_generator_forward.1} parent=1 // pred_check_branch
      %170 = sbr.rel (0) target = $region77
    $region76: #{traj_generator_forward.1} parent=1 // pred_region
      _
    $region77: #{traj_generator_forward.1} parent=1 // pred_fallthru
      _
    // Predicated region
    $region78: #{traj_generator_forward.1} parent=1 // pred_check
      _
    $region79: #{traj_generator_forward.1} parent=1 // pred_check_branch
      %172 = sbr.rel (0) target = $region81
    $region80: #{traj_generator_forward.1} parent=1 // pred_region
      %174 = dma.done [#allocation4], 256
    $region81: #{traj_generator_forward.1} parent=1 // pred_fallthru
      _
    // Predicated region
    $region82: #{traj_generator_forward.1} parent=1 // pred_check
      _
    $region83: #{traj_generator_forward.1} parent=1 // pred_check_branch
      %176 = sbr.rel (0) target = $region85
    $region84: #{traj_generator_forward.1} parent=1 // pred_region
      %178 = dma.done [#allocation6], 16
    $region85: #{traj_generator_forward.1} parent=1 // pred_fallthru
      _
    // Predicated region
    $region86: #{traj_generator_forward.1} parent=1 // pred_check
      _
    $region87: #{traj_generator_forward.1} parent=1 // pred_check_branch
      %180 = sbr.rel (0) target = $region89
    $region88: #{traj_generator_forward.1} parent=1 // pred_region
      %182 = dma.done [#allocation6], 256
    $region89: #{traj_generator_forward.1} parent=1 // pred_fallthru
      _
    // Predicated region
    $region90: #{traj_generator_forward.1} parent=1 // pred_check
      _
    $region91: #{traj_generator_forward.1} parent=1 // pred_check_branch
      %184 = sbr.rel (0) target = $region93
    $region92: #{traj_generator_forward.1} parent=1 // pred_region
      %186 = dma.done [#allocation9], 16
    $region93: #{traj_generator_forward.1} parent=1 // pred_fallthru
      _
    // Predicated region
    $region94: #{traj_generator_forward.1} parent=1 // pred_check
      _
    $region95: #{traj_generator_forward.1} parent=1 // pred_check_branch
      %188 = sbr.rel (0) target = $region97
    $region96: #{traj_generator_forward.1} parent=1 // pred_region
      %190 = dma.done [#allocation9], 1024
    $region97: #{traj_generator_forward.1} parent=1 // pred_fallthru
      _
    // Predicated region
    $region98: #{traj_generator_forward.1} parent=1 // pred_check
      _
    $region99: #{traj_generator_forward.1} parent=1 // pred_check_branch
      %192 = sbr.rel (0) target = $region101
    $region100: #{traj_generator_forward.1} parent=1 // pred_region
      %194 = dma.done [#allocation12], 16
    $region101: #{traj_generator_forward.1} parent=1 // pred_fallthru
      _
    // Predicated region
    $region102: #{traj_generator_forward.1} parent=1 // pred_check
      _
    $region103: #{traj_generator_forward.1} parent=1 // pred_check_branch
      %196 = sbr.rel (0) target = $region105
    $region104: #{traj_generator_forward.1} parent=1 // pred_region
      %198 = dma.done [#allocation12], 512
    $region105: #{traj_generator_forward.1} parent=1 // pred_fallthru
      _
    // Predicated region
    $region106: #{traj_generator_forward.1} parent=1 // pred_check
      _
    $region107: #{traj_generator_forward.1} parent=1 // pred_check_branch
      %200 = sbr.rel (0) target = $region109
    $region108: #{traj_generator_forward.1} parent=1 // pred_region
      %202 = dma.done [#allocation15], 16
    $region109: #{traj_generator_forward.1} parent=1 // pred_fallthru
      _
    // Predicated region
    $region110: #{traj_generator_forward.1} parent=1 // pred_check
      _
    $region111: #{traj_generator_forward.1} parent=1 // pred_check_branch
      %204 = sbr.rel (0) target = $region113
    $region112: #{traj_generator_forward.1} parent=1 // pred_region
      %206 = dma.done [#allocation15], 512
    $region113: #{traj_generator_forward.1} parent=1 // pred_fallthru
      _
    // Predicated region
    $region114: #{traj_generator_forward.1} parent=1 // pred_check
      _
    $region115: #{traj_generator_forward.1} parent=1 // pred_check_branch
      %208 = sbr.rel (0) target = $region117
    $region116: #{traj_generator_forward.1} parent=1 // pred_region
      %210 = dma.done [#allocation18], 512
    $region117: #{traj_generator_forward.1} parent=1 // pred_fallthru
      _
    %s211 = sld [smem:[#allocation2]]
    %v212 = vld [vmem:[%s1] sm:$0x3]
    %v213 = vld [vmem:[%s2] sm:$0x3]
    %215 = vset.pattern.permute.xlu0 0
    %216 = vperm.xlu0 %215, %v212
    %v217 = vpop.permute.xlu0 %216
    %v219 = vmul.f32 %v217, %v213
    %220 = vset.pattern.permute.xlu0 1
    %221 = vperm.xlu0 %220, %v212
    %v222 = vpop.permute.xlu0 %221
    %v224 = vmul.f32 %v222, %v213
    %225 = vset.pattern.permute.xlu0 2
    %226 = vperm.xlu0 %225, %v212
    %v227 = vpop.permute.xlu0 %226
    %v229 = vmul.f32 %v227, %v213
    %v230 = vld [vmem:[%s3] sm:$0x3]
    %232 = vrot.lane.b32.xlu0 %v224, 4
    %v233 = vpop.permute.xlu0 %232
    %236 = vrot.lane.b32.xlu0 %v229, 8
    %v237 = vpop.permute.xlu0 %236
    %240 = vrot.lane.b32.xlu0 %v230, 12
    %v241 = vpop.permute.xlu0 %240
    %vm243 = vcmask 31744
    %v244 = vsel %vm243, %v219, %v233
    %vm245 = vcmask 64512
    %v246 = vsel %vm245, %v244, %v237
    %vm247 = vcmask 97280
    %v248 = vsel %vm247, %v246, %v241
    %vm249 = vcmask 1041408
    %v250 = vsel %vm249, %v248, 0.0
    %v251 = vld [vmem:[#allocation3] sm:$0xff]
    %v252 = vld [vmem:[#allocation3 + $0x8] sm:$0x3f]
    %v253 = vld [vmem:[#allocation5] sm:$0x1]
    %v255 = vperm.slane %v253, 0
    %vm257 = vcmask 113664
    %v259 = vsel %vm257, %v250, 0
    %vm261 = vcmask 1045504
    %v263 = vsel %vm261, %v252, 0
    %265 = vmatpush.msra.mxu0 0.0
    %266 = vmatpush.msra.mxu0 0.0
    %267 = vmatpush.msra.mxu0 0.0
    %268 = vmatpush.msra.mxu0 0.0
    %269 = vmatpush.msra.mxu0 0.0
    %270 = vmatpush.msra.mxu0 0.0
    %271 = vmatpush.msra.mxu0 0.0
    %272 = vmatpush.msra.mxu0 0.0
    %273 = vmatpush.msra.mxu0 0.0
    %274 = vmatpush.msra.mxu0 0.0
    %275 = vmatpush.msra.mxu0 0.0
    %276 = vmatpush.msra.mxu0 0.0
    %277 = vmatpush.msra.mxu0 0.0
    %278 = vmatpush.msra.mxu0 0.0
    %279 = vmatpush.msra.mxu0 %v263
    %280 = vmatpush.msra.mxu0 %v251
    %281 = vmatmul.f32.gmra.mxu0 %v259
    %v282 = vpop.f32.mrf.mxu0
    %v283 = vadd.f32 %v255, %v282
    %284 = vdwg.mxu0
    %vm285 = vcmp.gt.f32.partialorder %v283, 0.0
    %v286 = vstv %s211
    %v287 = vmul.f32 %v286, %v283
    %v288 = vsel %vm285, %v283, %v287
    %290 = vrot.lane.b32.xlu0 %v288, 114
    %v291 = vpop.permute.xlu0 %290
    %292 = vrot.lane.b32.xlu0 %v288, 100
    %v293 = vpop.permute.xlu0 %292
    %294 = vrot.lane.b32.xlu0 %v288, 86
    %v295 = vpop.permute.xlu0 %294
    %296 = vrot.lane.b32.xlu0 %v288, 72
    %v297 = vpop.permute.xlu0 %296
    %298 = vrot.lane.b32.xlu0 %v288, 58
    %v299 = vpop.permute.xlu0 %298
    %300 = vrot.lane.b32.xlu0 %v288, 44
    %v301 = vpop.permute.xlu0 %300
    %302 = vrot.lane.b32.xlu0 %v288, 30
    %v303 = vpop.permute.xlu0 %302
    %v304 = vld [vmem:[#allocation7] sm:$0xff]
    %v305 = vld [vmem:[#allocation7 + $0x8] sm:$0x3f]
    %v306 = vld [vmem:[#allocation8] sm:$0x1]
    %v308 = vperm.slane %v306, 0
    %v310 = vsel %vm257, %v288, 0
    %v312 = vsel %vm257, %v291, 0
    %v314 = vsel %vm257, %v293, 0
    %v316 = vsel %vm257, %v295, 0
    %v318 = vsel %vm257, %v297, 0
    %v320 = vsel %vm257, %v299, 0
    %v322 = vsel %vm257, %v301, 0
    %v324 = vsel %vm257, %v303, 0
    %v327 = vsel %vm261, %v305, 0
    %329 = vmatpush.msra.mxu0 0.0
    %330 = vmatpush.msra.mxu0 0.0
    %331 = vmatpush.msra.mxu0 0.0
    %332 = vmatpush.msra.mxu0 0.0
    %333 = vmatpush.msra.mxu0 0.0
    %334 = vmatpush.msra.mxu0 0.0
    %335 = vmatpush.msra.mxu0 0.0
    %336 = vmatpush.msra.mxu0 0.0
    %337 = vmatpush.msra.mxu0 0.0
    %338 = vmatpush.msra.mxu0 0.0
    %339 = vmatpush.msra.mxu0 0.0
    %340 = vmatpush.msra.mxu0 0.0
    %341 = vmatpush.msra.mxu0 0.0
    %342 = vmatpush.msra.mxu0 0.0
    %343 = vmatpush.msra.mxu0 %v327
    %344 = vmatpush.msra.mxu0 %v304
    %345 = vmatmul.f32.gmra.mxu0 %v310
    %v346 = vpop.f32.mrf.mxu0
    %v347 = vadd.f32 %v308, %v346
    %348 = vmatmul.f32.gmra.mxu0 %v312
    %v349 = vpop.f32.mrf.mxu0
    %v350 = vadd.f32 %v308, %v349
    %351 = vmatmul.f32.gmra.mxu0 %v314
    %v352 = vpop.f32.mrf.mxu0
    %v353 = vadd.f32 %v308, %v352
    %354 = vmatmul.f32.gmra.mxu0 %v316
    %v355 = vpop.f32.mrf.mxu0
    %v356 = vadd.f32 %v308, %v355
    %357 = vmatmul.f32.gmra.mxu0 %v318
    %v358 = vpop.f32.mrf.mxu0
    %v359 = vadd.f32 %v308, %v358
    %360 = vmatmul.f32.gmra.mxu0 %v320
    %v361 = vpop.f32.mrf.mxu0
    %v362 = vadd.f32 %v308, %v361
    %363 = vmatmul.f32.gmra.mxu0 %v322
    %v364 = vpop.f32.mrf.mxu0
    %v365 = vadd.f32 %v308, %v364
    %366 = vmatmul.f32.gmra.mxu0 %v324
    %v367 = vpop.f32.mrf.mxu0
    %v368 = vadd.f32 %v308, %v367
    %369 = vdwg.mxu0
    %v370 = vld [vmem:[%s8] sm:$0xff]
    %v371 = vld [vmem:[%s8 + $0x8] sm:$0xff]
    %v372 = vld [vmem:[%s8 + $0x10] sm:$0xff]
    %v373 = vld [vmem:[%s8 + $0x18] sm:$0xff]
    %vm374 = vcmask 261120
    %v376 = vsel %vm374, 0.0, 0
    %378 = vmatpush.msra.mxu0 0.0
    %379 = vmatpush.msra.mxu0 0.0
    %380 = vmatpush.msra.mxu0 0.0
    %381 = vmatpush.msra.mxu0 0.0
    %382 = vmatpush.msra.mxu0 0.0
    %383 = vmatpush.msra.mxu0 0.0
    %384 = vmatpush.msra.mxu0 0.0
    %385 = vmatpush.msra.mxu0 0.0
    %386 = vmatpush.msra.mxu0 0.0
    %387 = vmatpush.msra.mxu0 0.0
    %388 = vmatpush.msra.mxu0 0.0
    %389 = vmatpush.msra.mxu0 0.0
    %390 = vmatpush.msra.mxu0 %v373
    %391 = vmatpush.msra.mxu0 %v372
    %392 = vmatpush.msra.mxu0 %v371
    %393 = vmatpush.msra.mxu0 %v370
    %394 = vmatmul.f32.gmra.mxu0 %v376
    %v395 = vpop.f32.mrf.mxu0
    %v396 = vadd.f32 0.0, %v395
    %397 = vdwg.mxu0
    %v398 = vadd.f32 %v347, %v396
    %v399 = vxor.u32 %v398, 2147483648
    %v400 = vmul.f32 %v399, 1.442695
    %v401 = vpow.pop %v400
    %v402 = vadd.f32 %v401, 1.0
    %v403 = vrcp.pop %v402
    %v404 = vmul.f32 %v402, %v403
    %v405 = vsub.f32 1.0, %v404
    %v406 = vmul.f32 %v403, %v405
    %v407 = vadd.f32 %v403, %v406
    %vm408 = vweird.f32 %v402
    %vm409 = vweird.f32 %v403
    %vm410 = vmor %vm408, %vm409
    %v411 = vsel %vm410, %v403, %v407
    %v412 = vand.u32 2147483647, %v402
    %vm413 = vcmp.eq.f32.partialorder %v412, 8.507059e+37
    %v414 = vand.u32 %v402, 2147483648
    %v415 = vor.u32 1.1754944e-38, %v414
    %v416 = vsel %vm413, %v415, %v411
    %v417 = vmul.f32 1.0, %v416
    %v418 = vtanh.pop %v398
    %v419 = vmul.f32 %v417, 0.0
    %421 = vrot.lane.b32.xlu0 %v418, 32
    %v422 = vpop.permute.xlu0 %421
    %v424 = vmul.f32 %v417, %v422
    %426 = vrot.lane.b32.xlu0 %v424, 32
    %v427 = vpop.permute.xlu0 %426
    %v429 = vadd.f32 %v419, %v427
    %v430 = vtanh.pop %v429
    %432 = vrot.lane.b32.xlu0 %v430, 32
    %v433 = vpop.permute.xlu0 %432
    %v435 = vmul.f32 %v417, %v433
    %437 = vrot.lane.b32.xlu0 %v435, 64
    %v438 = vpop.permute.xlu0 %437
    %v440 = vsel %vm374, %v438, 0.0
    %v441 = vld [vmem:[#allocation10] sm:$0xff]
    %v442 = vld [vmem:[#allocation10 + $0x8] sm:$0xff]
    %v443 = vld [vmem:[#allocation10 + $0x10] sm:$0xff]
    %v444 = vld [vmem:[#allocation10 + $0x18] sm:$0xff]
    %v445 = vld [vmem:[#allocation10 + $0x20] sm:$0xff]
    %v446 = vld [vmem:[#allocation10 + $0x28] sm:$0xff]
    %v447 = vld [vmem:[#allocation10 + $0x30] sm:$0xff]
    %v448 = vld [vmem:[#allocation10 + $0x38] sm:$0xff]
    %v449 = vld [vmem:[#allocation11] sm:$0x1]
    %v451 = vperm.slane %v449, 0
    %vm453 = vcmask 523264
    %v455 = vsel %vm453, %v440, 0
    %457 = vmatpush.msra.mxu0 0.0
    %458 = vmatpush.msra.mxu0 0.0
    %459 = vmatpush.msra.mxu0 0.0
    %460 = vmatpush.msra.mxu0 0.0
    %461 = vmatpush.msra.mxu0 0.0
    %462 = vmatpush.msra.mxu0 0.0
    %463 = vmatpush.msra.mxu0 0.0
    %464 = vmatpush.msra.mxu0 0.0
    %465 = vmatpush.msra.mxu0 %v448
    %466 = vmatpush.msra.mxu0 %v447
    %467 = vmatpush.msra.mxu0 %v446
    %468 = vmatpush.msra.mxu0 %v445
    %469 = vmatpush.msra.mxu0 %v444
    %470 = vmatpush.msra.mxu0 %v443
    %471 = vmatpush.msra.mxu0 %v442
    %472 = vmatpush.msra.mxu0 %v441
    %473 = vmatmul.f32.gmra.mxu0 %v455
    %v474 = vpop.f32.mrf.mxu0
    %v475 = vadd.f32 %v451, %v474
    %476 = vdwg.mxu0
    %v477 = vxor.u32 %v475, 2147483648
    %v478 = vmul.f32 %v477, 1.442695
    %v479 = vpow.pop %v478
    %v480 = vadd.f32 %v479, 1.0
    %v481 = vrcp.pop %v480
    %v482 = vmul.f32 %v480, %v481
    %v483 = vsub.f32 1.0, %v482
    %v484 = vmul.f32 %v481, %v483
    %v485 = vadd.f32 %v481, %v484
    %vm486 = vweird.f32 %v480
    %vm487 = vweird.f32 %v481
    %vm488 = vmor %vm486, %vm487
    %v489 = vsel %vm488, %v481, %v485
    %v490 = vand.u32 2147483647, %v480
    %vm491 = vcmp.eq.f32.partialorder %v490, 8.507059e+37
    %v492 = vand.u32 %v480, 2147483648
    %v493 = vor.u32 1.1754944e-38, %v492
    %v494 = vsel %vm491, %v493, %v489
    %v495 = vmul.f32 1.0, %v494
    %v496 = vtanh.pop %v475
    %v497 = vmul.f32 %v495, 0.0
    %499 = vrot.lane.b32.xlu0 %v496, 32
    %v500 = vpop.permute.xlu0 %499
    %v502 = vmul.f32 %v495, %v500
    %504 = vrot.lane.b32.xlu0 %v502, 32
    %v505 = vpop.permute.xlu0 %504
    %v507 = vadd.f32 %v497, %v505
    %v508 = vtanh.pop %v507
    %510 = vrot.lane.b32.xlu0 %v508, 32
    %v511 = vpop.permute.xlu0 %510
    %v513 = vmul.f32 %v495, %v511
    %v514 = vsel %vm374, %v438, 0
    %516 = vmatpush.msra.mxu0 0.0
    %517 = vmatpush.msra.mxu0 0.0
    %518 = vmatpush.msra.mxu0 0.0
    %519 = vmatpush.msra.mxu0 0.0
    %520 = vmatpush.msra.mxu0 0.0
    %521 = vmatpush.msra.mxu0 0.0
    %522 = vmatpush.msra.mxu0 0.0
    %523 = vmatpush.msra.mxu0 0.0
    %524 = vmatpush.msra.mxu0 0.0
    %525 = vmatpush.msra.mxu0 0.0
    %526 = vmatpush.msra.mxu0 0.0
    %527 = vmatpush.msra.mxu0 0.0
    %528 = vmatpush.msra.mxu0 %v373
    %529 = vmatpush.msra.mxu0 %v372
    %530 = vmatpush.msra.mxu0 %v371
    %531 = vmatpush.msra.mxu0 %v370
    %532 = vmatmul.f32.gmra.mxu0 %v514
    %v533 = vpop.f32.mrf.mxu0
    %v534 = vadd.f32 0.0, %v533
    %535 = vdwg.mxu0
    %v536 = vadd.f32 %v350, %v534
    %v537 = vxor.u32 %v536, 2147483648
    %v538 = vmul.f32 %v537, 1.442695
    %v539 = vpow.pop %v538
    %v540 = vadd.f32 %v539, 1.0
    %v541 = vrcp.pop %v540
    %v542 = vmul.f32 %v540, %v541
    %v543 = vsub.f32 1.0, %v542
    %v544 = vmul.f32 %v541, %v543
    %v545 = vadd.f32 %v541, %v544
    %vm546 = vweird.f32 %v540
    %vm547 = vweird.f32 %v541
    %vm548 = vmor %vm546, %vm547
    %v549 = vsel %vm548, %v541, %v545
    %v550 = vand.u32 2147483647, %v540
    %vm551 = vcmp.eq.f32.partialorder %v550, 8.507059e+37
    %v552 = vand.u32 %v540, 2147483648
    %v553 = vor.u32 1.1754944e-38, %v552
    %v554 = vsel %vm551, %v553, %v549
    %v555 = vmul.f32 1.0, %v554
    %v556 = vtanh.pop %v536
    %v557 = vmul.f32 %v555, %v429
    %559 = vrot.lane.b32.xlu0 %v556, 32
    %v560 = vpop.permute.xlu0 %559
    %v562 = vmul.f32 %v555, %v560
    %564 = vrot.lane.b32.xlu0 %v562, 32
    %v565 = vpop.permute.xlu0 %564
    %v567 = vadd.f32 %v557, %v565
    %v568 = vtanh.pop %v567
    %570 = vrot.lane.b32.xlu0 %v568, 32
    %v571 = vpop.permute.xlu0 %570
    %v573 = vmul.f32 %v555, %v571
    %575 = vrot.lane.b32.xlu0 %v573, 64
    %v576 = vpop.permute.xlu0 %575
    %579 = vrot.lane.b32.xlu0 %v513, 96
    %v580 = vpop.permute.xlu0 %579
    %v582 = vsel %vm374, %v576, %v580
    %v584 = vsel %vm453, %v582, 0
    %586 = vmatpush.msra.mxu0 0.0
    %587 = vmatpush.msra.mxu0 0.0
    %588 = vmatpush.msra.mxu0 0.0
    %589 = vmatpush.msra.mxu0 0.0
    %590 = vmatpush.msra.mxu0 0.0
    %591 = vmatpush.msra.mxu0 0.0
    %592 = vmatpush.msra.mxu0 0.0
    %593 = vmatpush.msra.mxu0 0.0
    %594 = vmatpush.msra.mxu0 %v448
    %595 = vmatpush.msra.mxu0 %v447
    %596 = vmatpush.msra.mxu0 %v446
    %597 = vmatpush.msra.mxu0 %v445
    %598 = vmatpush.msra.mxu0 %v444
    %599 = vmatpush.msra.mxu0 %v443
    %600 = vmatpush.msra.mxu0 %v442
    %601 = vmatpush.msra.mxu0 %v441
    %602 = vmatmul.f32.gmra.mxu0 %v584
    %v603 = vpop.f32.mrf.mxu0
    %v604 = vadd.f32 %v451, %v603
    %605 = vdwg.mxu0
    %v606 = vxor.u32 %v604, 2147483648
    %v607 = vmul.f32 %v606, 1.442695
    %v608 = vpow.pop %v607
    %v609 = vadd.f32 %v608, 1.0
    %v610 = vrcp.pop %v609
    %v611 = vmul.f32 %v609, %v610
    %v612 = vsub.f32 1.0, %v611
    %v613 = vmul.f32 %v610, %v612
    %v614 = vadd.f32 %v610, %v613
    %vm615 = vweird.f32 %v609
    %vm616 = vweird.f32 %v610
    %vm617 = vmor %vm615, %vm616
    %v618 = vsel %vm617, %v610, %v614
    %v619 = vand.u32 2147483647, %v609
    %vm620 = vcmp.eq.f32.partialorder %v619, 8.507059e+37
    %v621 = vand.u32 %v609, 2147483648
    %v622 = vor.u32 1.1754944e-38, %v621
    %v623 = vsel %vm620, %v622, %v618
    %v624 = vmul.f32 1.0, %v623
    %v625 = vtanh.pop %v604
    %v626 = vmul.f32 %v624, %v507
    %628 = vrot.lane.b32.xlu0 %v625, 32
    %v629 = vpop.permute.xlu0 %628
    %v631 = vmul.f32 %v624, %v629
    %633 = vrot.lane.b32.xlu0 %v631, 32
    %v634 = vpop.permute.xlu0 %633
    %v636 = vadd.f32 %v626, %v634
    %v637 = vtanh.pop %v636
    %639 = vrot.lane.b32.xlu0 %v637, 32
    %v640 = vpop.permute.xlu0 %639
    %v642 = vmul.f32 %v624, %v640
    %v643 = vsel %vm374, %v576, 0
    %645 = vmatpush.msra.mxu0 0.0
    %646 = vmatpush.msra.mxu0 0.0
    %647 = vmatpush.msra.mxu0 0.0
    %648 = vmatpush.msra.mxu0 0.0
    %649 = vmatpush.msra.mxu0 0.0
    %650 = vmatpush.msra.mxu0 0.0
    %651 = vmatpush.msra.mxu0 0.0
    %652 = vmatpush.msra.mxu0 0.0
    %653 = vmatpush.msra.mxu0 0.0
    %654 = vmatpush.msra.mxu0 0.0
    %655 = vmatpush.msra.mxu0 0.0
    %656 = vmatpush.msra.mxu0 0.0
    %657 = vmatpush.msra.mxu0 %v373
    %658 = vmatpush.msra.mxu0 %v372
    %659 = vmatpush.msra.mxu0 %v371
    %660 = vmatpush.msra.mxu0 %v370
    %661 = vmatmul.f32.gmra.mxu0 %v643
    %v662 = vpop.f32.mrf.mxu0
    %v663 = vadd.f32 0.0, %v662
    %664 = vdwg.mxu0
    %v665 = vadd.f32 %v353, %v663
    %v666 = vxor.u32 %v665, 2147483648
    %v667 = vmul.f32 %v666, 1.442695
    %v668 = vpow.pop %v667
    %v669 = vadd.f32 %v668, 1.0
    %v670 = vrcp.pop %v669
    %v671 = vmul.f32 %v669, %v670
    %v672 = vsub.f32 1.0, %v671
    %v673 = vmul.f32 %v670, %v672
    %v674 = vadd.f32 %v670, %v673
    %vm675 = vweird.f32 %v669
    %vm676 = vweird.f32 %v670
    %vm677 = vmor %vm675, %vm676
    %v678 = vsel %vm677, %v670, %v674
    %v679 = vand.u32 2147483647, %v669
    %vm680 = vcmp.eq.f32.partialorder %v679, 8.507059e+37
    %v681 = vand.u32 %v669, 2147483648
    %v682 = vor.u32 1.1754944e-38, %v681
    %v683 = vsel %vm680, %v682, %v678
    %v684 = vmul.f32 1.0, %v683
    %v685 = vtanh.pop %v665
    %v686 = vmul.f32 %v684, %v567
    %688 = vrot.lane.b32.xlu0 %v685, 32
    %v689 = vpop.permute.xlu0 %688
    %v691 = vmul.f32 %v684, %v689
    %693 = vrot.lane.b32.xlu0 %v691, 32
    %v694 = vpop.permute.xlu0 %693
    %v696 = vadd.f32 %v686, %v694
    %v697 = vtanh.pop %v696
    %699 = vrot.lane.b32.xlu0 %v697, 32
    %v700 = vpop.permute.xlu0 %699
    %v702 = vmul.f32 %v684, %v700
    %704 = vrot.lane.b32.xlu0 %v702, 64
    %v705 = vpop.permute.xlu0 %704
    %708 = vrot.lane.b32.xlu0 %v642, 96
    %v709 = vpop.permute.xlu0 %708
    %v711 = vsel %vm374, %v705, %v709
    %v713 = vsel %vm453, %v711, 0
    %715 = vmatpush.msra.mxu0 0.0
    %716 = vmatpush.msra.mxu0 0.0
    %717 = vmatpush.msra.mxu0 0.0
    %718 = vmatpush.msra.mxu0 0.0
    %719 = vmatpush.msra.mxu0 0.0
    %720 = vmatpush.msra.mxu0 0.0
    %721 = vmatpush.msra.mxu0 0.0
    %722 = vmatpush.msra.mxu0 0.0
    %723 = vmatpush.msra.mxu0 %v448
    %724 = vmatpush.msra.mxu0 %v447
    %725 = vmatpush.msra.mxu0 %v446
    %726 = vmatpush.msra.mxu0 %v445
    %727 = vmatpush.msra.mxu0 %v444
    %728 = vmatpush.msra.mxu0 %v443
    %729 = vmatpush.msra.mxu0 %v442
    %730 = vmatpush.msra.mxu0 %v441
    %731 = vmatmul.f32.gmra.mxu0 %v713
    %v732 = vpop.f32.mrf.mxu0
    %v733 = vadd.f32 %v451, %v732
    %734 = vdwg.mxu0
    %v735 = vxor.u32 %v733, 2147483648
    %v736 = vmul.f32 %v735, 1.442695
    %v737 = vpow.pop %v736
    %v738 = vadd.f32 %v737, 1.0
    %v739 = vrcp.pop %v738
    %v740 = vmul.f32 %v738, %v739
    %v741 = vsub.f32 1.0, %v740
    %v742 = vmul.f32 %v739, %v741
    %v743 = vadd.f32 %v739, %v742
    %vm744 = vweird.f32 %v738
    %vm745 = vweird.f32 %v739
    %vm746 = vmor %vm744, %vm745
    %v747 = vsel %vm746, %v739, %v743
    %v748 = vand.u32 2147483647, %v738
    %vm749 = vcmp.eq.f32.partialorder %v748, 8.507059e+37
    %v750 = vand.u32 %v738, 2147483648
    %v751 = vor.u32 1.1754944e-38, %v750
    %v752 = vsel %vm749, %v751, %v747
    %v753 = vmul.f32 1.0, %v752
    %v754 = vtanh.pop %v733
    %v755 = vmul.f32 %v753, %v636
    %757 = vrot.lane.b32.xlu0 %v754, 32
    %v758 = vpop.permute.xlu0 %757
    %v760 = vmul.f32 %v753, %v758
    %762 = vrot.lane.b32.xlu0 %v760, 32
    %v763 = vpop.permute.xlu0 %762
    %v765 = vadd.f32 %v755, %v763
    %v766 = vtanh.pop %v765
    %768 = vrot.lane.b32.xlu0 %v766, 32
    %v769 = vpop.permute.xlu0 %768
    %v771 = vmul.f32 %v753, %v769
    %v772 = vsel %vm374, %v705, 0
    %774 = vmatpush.msra.mxu0 0.0
    %775 = vmatpush.msra.mxu0 0.0
    %776 = vmatpush.msra.mxu0 0.0
    %777 = vmatpush.msra.mxu0 0.0
    %778 = vmatpush.msra.mxu0 0.0
    %779 = vmatpush.msra.mxu0 0.0
    %780 = vmatpush.msra.mxu0 0.0
    %781 = vmatpush.msra.mxu0 0.0
    %782 = vmatpush.msra.mxu0 0.0
    %783 = vmatpush.msra.mxu0 0.0
    %784 = vmatpush.msra.mxu0 0.0
    %785 = vmatpush.msra.mxu0 0.0
    %786 = vmatpush.msra.mxu0 %v373
    %787 = vmatpush.msra.mxu0 %v372
    %788 = vmatpush.msra.mxu0 %v371
    %789 = vmatpush.msra.mxu0 %v370
    %790 = vmatmul.f32.gmra.mxu0 %v772
    %v791 = vpop.f32.mrf.mxu0
    %v792 = vadd.f32 0.0, %v791
    %793 = vdwg.mxu0
    %v794 = vadd.f32 %v356, %v792
    %v795 = vxor.u32 %v794, 2147483648
    %v796 = vmul.f32 %v795, 1.442695
    %v797 = vpow.pop %v796
    %v798 = vadd.f32 %v797, 1.0
    %v799 = vrcp.pop %v798
    %v800 = vmul.f32 %v798, %v799
    %v801 = vsub.f32 1.0, %v800
    %v802 = vmul.f32 %v799, %v801
    %v803 = vadd.f32 %v799, %v802
    %vm804 = vweird.f32 %v798
    %vm805 = vweird.f32 %v799
    %vm806 = vmor %vm804, %vm805
    %v807 = vsel %vm806, %v799, %v803
    %v808 = vand.u32 2147483647, %v798
    %vm809 = vcmp.eq.f32.partialorder %v808, 8.507059e+37
    %v810 = vand.u32 %v798, 2147483648
    %v811 = vor.u32 1.1754944e-38, %v810
    %v812 = vsel %vm809, %v811, %v807
    %v813 = vmul.f32 1.0, %v812
    %v814 = vtanh.pop %v794
    %v815 = vmul.f32 %v813, %v696
    %817 = vrot.lane.b32.xlu0 %v814, 32
    %v818 = vpop.permute.xlu0 %817
    %v820 = vmul.f32 %v813, %v818
    %822 = vrot.lane.b32.xlu0 %v820, 32
    %v823 = vpop.permute.xlu0 %822
    %v825 = vadd.f32 %v815, %v823
    %v826 = vtanh.pop %v825
    %828 = vrot.lane.b32.xlu0 %v826, 32
    %v829 = vpop.permute.xlu0 %828
    %v831 = vmul.f32 %v813, %v829
    %833 = vrot.lane.b32.xlu0 %v831, 64
    %v834 = vpop.permute.xlu0 %833
    %837 = vrot.lane.b32.xlu0 %v771, 96
    %v838 = vpop.permute.xlu0 %837
    %v840 = vsel %vm374, %v834, %v838
    %v842 = vsel %vm453, %v840, 0
    %844 = vmatpush.msra.mxu0 0.0
    %845 = vmatpush.msra.mxu0 0.0
    %846 = vmatpush.msra.mxu0 0.0
    %847 = vmatpush.msra.mxu0 0.0
    %848 = vmatpush.msra.mxu0 0.0
    %849 = vmatpush.msra.mxu0 0.0
    %850 = vmatpush.msra.mxu0 0.0
    %851 = vmatpush.msra.mxu0 0.0
    %852 = vmatpush.msra.mxu0 %v448
    %853 = vmatpush.msra.mxu0 %v447
    %854 = vmatpush.msra.mxu0 %v446
    %855 = vmatpush.msra.mxu0 %v445
    %856 = vmatpush.msra.mxu0 %v444
    %857 = vmatpush.msra.mxu0 %v443
    %858 = vmatpush.msra.mxu0 %v442
    %859 = vmatpush.msra.mxu0 %v441
    %860 = vmatmul.f32.gmra.mxu0 %v842
    %v861 = vpop.f32.mrf.mxu0
    %v862 = vadd.f32 %v451, %v861
    %863 = vdwg.mxu0
    %v864 = vxor.u32 %v862, 2147483648
    %v865 = vmul.f32 %v864, 1.442695
    %v866 = vpow.pop %v865
    %v867 = vadd.f32 %v866, 1.0
    %v868 = vrcp.pop %v867
    %v869 = vmul.f32 %v867, %v868
    %v870 = vsub.f32 1.0, %v869
    %v871 = vmul.f32 %v868, %v870
    %v872 = vadd.f32 %v868, %v871
    %vm873 = vweird.f32 %v867
    %vm874 = vweird.f32 %v868
    %vm875 = vmor %vm873, %vm874
    %v876 = vsel %vm875, %v868, %v872
    %v877 = vand.u32 2147483647, %v867
    %vm878 = vcmp.eq.f32.partialorder %v877, 8.507059e+37
    %v879 = vand.u32 %v867, 2147483648
    %v880 = vor.u32 1.1754944e-38, %v879
    %v881 = vsel %vm878, %v880, %v876
    %v882 = vmul.f32 1.0, %v881
    %v883 = vtanh.pop %v862
    %v884 = vmul.f32 %v882, %v765
    %886 = vrot.lane.b32.xlu0 %v883, 32
    %v887 = vpop.permute.xlu0 %886
    %v889 = vmul.f32 %v882, %v887
    %891 = vrot.lane.b32.xlu0 %v889, 32
    %v892 = vpop.permute.xlu0 %891
    %v894 = vadd.f32 %v884, %v892
    %v895 = vtanh.pop %v894
    %897 = vrot.lane.b32.xlu0 %v895, 32
    %v898 = vpop.permute.xlu0 %897
    %v900 = vmul.f32 %v882, %v898
    %v901 = vsel %vm374, %v834, 0
    %903 = vmatpush.msra.mxu0 0.0
    %904 = vmatpush.msra.mxu0 0.0
    %905 = vmatpush.msra.mxu0 0.0
    %906 = vmatpush.msra.mxu0 0.0
    %907 = vmatpush.msra.mxu0 0.0
    %908 = vmatpush.msra.mxu0 0.0
    %909 = vmatpush.msra.mxu0 0.0
    %910 = vmatpush.msra.mxu0 0.0
    %911 = vmatpush.msra.mxu0 0.0
    %912 = vmatpush.msra.mxu0 0.0
    %913 = vmatpush.msra.mxu0 0.0
    %914 = vmatpush.msra.mxu0 0.0
    %915 = vmatpush.msra.mxu0 %v373
    %916 = vmatpush.msra.mxu0 %v372
    %917 = vmatpush.msra.mxu0 %v371
    %918 = vmatpush.msra.mxu0 %v370
    %919 = vmatmul.f32.gmra.mxu0 %v901
    %v920 = vpop.f32.mrf.mxu0
    %v921 = vadd.f32 0.0, %v920
    %922 = vdwg.mxu0
    %v923 = vadd.f32 %v359, %v921
    %v924 = vxor.u32 %v923, 2147483648
    %v925 = vmul.f32 %v924, 1.442695
    %v926 = vpow.pop %v925
    %v927 = vadd.f32 %v926, 1.0
    %v928 = vrcp.pop %v927
    %v929 = vmul.f32 %v927, %v928
    %v930 = vsub.f32 1.0, %v929
    %v931 = vmul.f32 %v928, %v930
    %v932 = vadd.f32 %v928, %v931
    %vm933 = vweird.f32 %v927
    %vm934 = vweird.f32 %v928
    %vm935 = vmor %vm933, %vm934
    %v936 = vsel %vm935, %v928, %v932
    %v937 = vand.u32 2147483647, %v927
    %vm938 = vcmp.eq.f32.partialorder %v937, 8.507059e+37
    %v939 = vand.u32 %v927, 2147483648
    %v940 = vor.u32 1.1754944e-38, %v939
    %v941 = vsel %vm938, %v940, %v936
    %v942 = vmul.f32 1.0, %v941
    %v943 = vtanh.pop %v923
    %v944 = vmul.f32 %v942, %v825
    %946 = vrot.lane.b32.xlu0 %v943, 32
    %v947 = vpop.permute.xlu0 %946
    %v949 = vmul.f32 %v942, %v947
    %951 = vrot.lane.b32.xlu0 %v949, 32
    %v952 = vpop.permute.xlu0 %951
    %v954 = vadd.f32 %v944, %v952
    %v955 = vtanh.pop %v954
    %957 = vrot.lane.b32.xlu0 %v955, 32
    %v958 = vpop.permute.xlu0 %957
    %v960 = vmul.f32 %v942, %v958
    %962 = vrot.lane.b32.xlu0 %v960, 64
    %v963 = vpop.permute.xlu0 %962
    %966 = vrot.lane.b32.xlu0 %v900, 96
    %v967 = vpop.permute.xlu0 %966
    %v969 = vsel %vm374, %v963, %v967
    %v971 = vsel %vm453, %v969, 0
    %973 = vmatpush.msra.mxu0 0.0
    %974 = vmatpush.msra.mxu0 0.0
    %975 = vmatpush.msra.mxu0 0.0
    %976 = vmatpush.msra.mxu0 0.0
    %977 = vmatpush.msra.mxu0 0.0
    %978 = vmatpush.msra.mxu0 0.0
    %979 = vmatpush.msra.mxu0 0.0
    %980 = vmatpush.msra.mxu0 0.0
    %981 = vmatpush.msra.mxu0 %v448
    %982 = vmatpush.msra.mxu0 %v447
    %983 = vmatpush.msra.mxu0 %v446
    %984 = vmatpush.msra.mxu0 %v445
    %985 = vmatpush.msra.mxu0 %v444
    %986 = vmatpush.msra.mxu0 %v443
    %987 = vmatpush.msra.mxu0 %v442
    %988 = vmatpush.msra.mxu0 %v441
    %989 = vmatmul.f32.gmra.mxu0 %v971
    %v990 = vpop.f32.mrf.mxu0
    %v991 = vadd.f32 %v451, %v990
    %992 = vdwg.mxu0
    %v993 = vxor.u32 %v991, 2147483648
    %v994 = vmul.f32 %v993, 1.442695
    %v995 = vpow.pop %v994
    %v996 = vadd.f32 %v995, 1.0
    %v997 = vrcp.pop %v996
    %v998 = vmul.f32 %v996, %v997
    %v999 = vsub.f32 1.0, %v998
    %v1000 = vmul.f32 %v997, %v999
    %v1001 = vadd.f32 %v997, %v1000
    %vm1002 = vweird.f32 %v996
    %vm1003 = vweird.f32 %v997
    %vm1004 = vmor %vm1002, %vm1003
    %v1005 = vsel %vm1004, %v997, %v1001
    %v1006 = vand.u32 2147483647, %v996
    %vm1007 = vcmp.eq.f32.partialorder %v1006, 8.507059e+37
    %v1008 = vand.u32 %v996, 2147483648
    %v1009 = vor.u32 1.1754944e-38, %v1008
    %v1010 = vsel %vm1007, %v1009, %v1005
    %v1011 = vmul.f32 1.0, %v1010
    %v1012 = vtanh.pop %v991
    %v1013 = vmul.f32 %v1011, %v894
    %1015 = vrot.lane.b32.xlu0 %v1012, 32
    %v1016 = vpop.permute.xlu0 %1015
    %v1018 = vmul.f32 %v1011, %v1016
    %1020 = vrot.lane.b32.xlu0 %v1018, 32
    %v1021 = vpop.permute.xlu0 %1020
    %v1023 = vadd.f32 %v1013, %v1021
    %v1024 = vtanh.pop %v1023
    %1026 = vrot.lane.b32.xlu0 %v1024, 32
    %v1027 = vpop.permute.xlu0 %1026
    %v1029 = vmul.f32 %v1011, %v1027
    %v1030 = vsel %vm374, %v963, 0
    %1032 = vmatpush.msra.mxu0 0.0
    %1033 = vmatpush.msra.mxu0 0.0
    %1034 = vmatpush.msra.mxu0 0.0
    %1035 = vmatpush.msra.mxu0 0.0
    %1036 = vmatpush.msra.mxu0 0.0
    %1037 = vmatpush.msra.mxu0 0.0
    %1038 = vmatpush.msra.mxu0 0.0
    %1039 = vmatpush.msra.mxu0 0.0
    %1040 = vmatpush.msra.mxu0 0.0
    %1041 = vmatpush.msra.mxu0 0.0
    %1042 = vmatpush.msra.mxu0 0.0
    %1043 = vmatpush.msra.mxu0 0.0
    %1044 = vmatpush.msra.mxu0 %v373
    %1045 = vmatpush.msra.mxu0 %v372
    %1046 = vmatpush.msra.mxu0 %v371
    %1047 = vmatpush.msra.mxu0 %v370
    %1048 = vmatmul.f32.gmra.mxu0 %v1030
    %v1049 = vpop.f32.mrf.mxu0
    %v1050 = vadd.f32 0.0, %v1049
    %1051 = vdwg.mxu0
    %v1052 = vadd.f32 %v362, %v1050
    %v1053 = vxor.u32 %v1052, 2147483648
    %v1054 = vmul.f32 %v1053, 1.442695
    %v1055 = vpow.pop %v1054
    %v1056 = vadd.f32 %v1055, 1.0
    %v1057 = vrcp.pop %v1056
    %v1058 = vmul.f32 %v1056, %v1057
    %v1059 = vsub.f32 1.0, %v1058
    %v1060 = vmul.f32 %v1057, %v1059
    %v1061 = vadd.f32 %v1057, %v1060
    %vm1062 = vweird.f32 %v1056
    %vm1063 = vweird.f32 %v1057
    %vm1064 = vmor %vm1062, %vm1063
    %v1065 = vsel %vm1064, %v1057, %v1061
    %v1066 = vand.u32 2147483647, %v1056
    %vm1067 = vcmp.eq.f32.partialorder %v1066, 8.507059e+37
    %v1068 = vand.u32 %v1056, 2147483648
    %v1069 = vor.u32 1.1754944e-38, %v1068
    %v1070 = vsel %vm1067, %v1069, %v1065
    %v1071 = vmul.f32 1.0, %v1070
    %v1072 = vtanh.pop %v1052
    %v1073 = vmul.f32 %v1071, %v954
    %1075 = vrot.lane.b32.xlu0 %v1072, 32
    %v1076 = vpop.permute.xlu0 %1075
    %v1078 = vmul.f32 %v1071, %v1076
    %1080 = vrot.lane.b32.xlu0 %v1078, 32
    %v1081 = vpop.permute.xlu0 %1080
    %v1083 = vadd.f32 %v1073, %v1081
    %v1084 = vtanh.pop %v1083
    %1086 = vrot.lane.b32.xlu0 %v1084, 32
    %v1087 = vpop.permute.xlu0 %1086
    %v1089 = vmul.f32 %v1071, %v1087
    %1091 = vrot.lane.b32.xlu0 %v1089, 64
    %v1092 = vpop.permute.xlu0 %1091
    %1095 = vrot.lane.b32.xlu0 %v1029, 96
    %v1096 = vpop.permute.xlu0 %1095
    %v1098 = vsel %vm374, %v1092, %v1096
    %v1100 = vsel %vm453, %v1098, 0
    %1102 = vmatpush.msra.mxu0 0.0
    %1103 = vmatpush.msra.mxu0 0.0
    %1104 = vmatpush.msra.mxu0 0.0
    %1105 = vmatpush.msra.mxu0 0.0
    %1106 = vmatpush.msra.mxu0 0.0
    %1107 = vmatpush.msra.mxu0 0.0
    %1108 = vmatpush.msra.mxu0 0.0
    %1109 = vmatpush.msra.mxu0 0.0
    %1110 = vmatpush.msra.mxu0 %v448
    %1111 = vmatpush.msra.mxu0 %v447
    %1112 = vmatpush.msra.mxu0 %v446
    %1113 = vmatpush.msra.mxu0 %v445
    %1114 = vmatpush.msra.mxu0 %v444
    %1115 = vmatpush.msra.mxu0 %v443
    %1116 = vmatpush.msra.mxu0 %v442
    %1117 = vmatpush.msra.mxu0 %v441
    %1118 = vmatmul.f32.gmra.mxu0 %v1100
    %v1119 = vpop.f32.mrf.mxu0
    %v1120 = vadd.f32 %v451, %v1119
    %1121 = vdwg.mxu0
    %v1122 = vxor.u32 %v1120, 2147483648
    %v1123 = vmul.f32 %v1122, 1.442695
    %v1124 = vpow.pop %v1123
    %v1125 = vadd.f32 %v1124, 1.0
    %v1126 = vrcp.pop %v1125
    %v1127 = vmul.f32 %v1125, %v1126
    %v1128 = vsub.f32 1.0, %v1127
    %v1129 = vmul.f32 %v1126, %v1128
    %v1130 = vadd.f32 %v1126, %v1129
    %vm1131 = vweird.f32 %v1125
    %vm1132 = vweird.f32 %v1126
    %vm1133 = vmor %vm1131, %vm1132
    %v1134 = vsel %vm1133, %v1126, %v1130
    %v1135 = vand.u32 2147483647, %v1125
    %vm1136 = vcmp.eq.f32.partialorder %v1135, 8.507059e+37
    %v1137 = vand.u32 %v1125, 2147483648
    %v1138 = vor.u32 1.1754944e-38, %v1137
    %v1139 = vsel %vm1136, %v1138, %v1134
    %v1140 = vmul.f32 1.0, %v1139
    %v1141 = vtanh.pop %v1120
    %v1142 = vmul.f32 %v1140, %v1023
    %1144 = vrot.lane.b32.xlu0 %v1141, 32
    %v1145 = vpop.permute.xlu0 %1144
    %v1147 = vmul.f32 %v1140, %v1145
    %1149 = vrot.lane.b32.xlu0 %v1147, 32
    %v1150 = vpop.permute.xlu0 %1149
    %v1152 = vadd.f32 %v1142, %v1150
    %v1153 = vtanh.pop %v1152
    %1155 = vrot.lane.b32.xlu0 %v1153, 32
    %v1156 = vpop.permute.xlu0 %1155
    %v1158 = vmul.f32 %v1140, %v1156
    %v1159 = vsel %vm374, %v1092, 0
    %1161 = vmatpush.msra.mxu0 0.0
    %1162 = vmatpush.msra.mxu0 0.0
    %1163 = vmatpush.msra.mxu0 0.0
    %1164 = vmatpush.msra.mxu0 0.0
    %1165 = vmatpush.msra.mxu0 0.0
    %1166 = vmatpush.msra.mxu0 0.0
    %1167 = vmatpush.msra.mxu0 0.0
    %1168 = vmatpush.msra.mxu0 0.0
    %1169 = vmatpush.msra.mxu0 0.0
    %1170 = vmatpush.msra.mxu0 0.0
    %1171 = vmatpush.msra.mxu0 0.0
    %1172 = vmatpush.msra.mxu0 0.0
    %1173 = vmatpush.msra.mxu0 %v373
    %1174 = vmatpush.msra.mxu0 %v372
    %1175 = vmatpush.msra.mxu0 %v371
    %1176 = vmatpush.msra.mxu0 %v370
    %1177 = vmatmul.f32.gmra.mxu0 %v1159
    %v1178 = vpop.f32.mrf.mxu0
    %v1179 = vadd.f32 0.0, %v1178
    %1180 = vdwg.mxu0
    %v1181 = vadd.f32 %v365, %v1179
    %v1182 = vxor.u32 %v1181, 2147483648
    %v1183 = vmul.f32 %v1182, 1.442695
    %v1184 = vpow.pop %v1183
    %v1185 = vadd.f32 %v1184, 1.0
    %v1186 = vrcp.pop %v1185
    %v1187 = vmul.f32 %v1185, %v1186
    %v1188 = vsub.f32 1.0, %v1187
    %v1189 = vmul.f32 %v1186, %v1188
    %v1190 = vadd.f32 %v1186, %v1189
    %vm1191 = vweird.f32 %v1185
    %vm1192 = vweird.f32 %v1186
    %vm1193 = vmor %vm1191, %vm1192
    %v1194 = vsel %vm1193, %v1186, %v1190
    %v1195 = vand.u32 2147483647, %v1185
    %vm1196 = vcmp.eq.f32.partialorder %v1195, 8.507059e+37
    %v1197 = vand.u32 %v1185, 2147483648
    %v1198 = vor.u32 1.1754944e-38, %v1197
    %v1199 = vsel %vm1196, %v1198, %v1194
    %v1200 = vmul.f32 1.0, %v1199
    %v1201 = vtanh.pop %v1181
    %v1202 = vmul.f32 %v1200, %v1083
    %1204 = vrot.lane.b32.xlu0 %v1201, 32
    %v1205 = vpop.permute.xlu0 %1204
    %v1207 = vmul.f32 %v1200, %v1205
    %1209 = vrot.lane.b32.xlu0 %v1207, 32
    %v1210 = vpop.permute.xlu0 %1209
    %v1212 = vadd.f32 %v1202, %v1210
    %v1213 = vtanh.pop %v1212
    %1215 = vrot.lane.b32.xlu0 %v1213, 32
    %v1216 = vpop.permute.xlu0 %1215
    %v1218 = vmul.f32 %v1200, %v1216
    %1220 = vrot.lane.b32.xlu0 %v1218, 64
    %v1221 = vpop.permute.xlu0 %1220
    %1224 = vrot.lane.b32.xlu0 %v1158, 96
    %v1225 = vpop.permute.xlu0 %1224
    %v1227 = vsel %vm374, %v1221, %v1225
    %v1229 = vsel %vm453, %v1227, 0
    %1231 = vmatpush.msra.mxu0 0.0
    %1232 = vmatpush.msra.mxu0 0.0
    %1233 = vmatpush.msra.mxu0 0.0
    %1234 = vmatpush.msra.mxu0 0.0
    %1235 = vmatpush.msra.mxu0 0.0
    %1236 = vmatpush.msra.mxu0 0.0
    %1237 = vmatpush.msra.mxu0 0.0
    %1238 = vmatpush.msra.mxu0 0.0
    %1239 = vmatpush.msra.mxu0 %v448
    %1240 = vmatpush.msra.mxu0 %v447
    %1241 = vmatpush.msra.mxu0 %v446
    %1242 = vmatpush.msra.mxu0 %v445
    %1243 = vmatpush.msra.mxu0 %v444
    %1244 = vmatpush.msra.mxu0 %v443
    %1245 = vmatpush.msra.mxu0 %v442
    %1246 = vmatpush.msra.mxu0 %v441
    %1247 = vmatmul.f32.gmra.mxu0 %v1229
    %v1248 = vpop.f32.mrf.mxu0
    %v1249 = vadd.f32 %v451, %v1248
    %1250 = vdwg.mxu0
    %v1251 = vxor.u32 %v1249, 2147483648
    %v1252 = vmul.f32 %v1251, 1.442695
    %v1253 = vpow.pop %v1252
    %v1254 = vadd.f32 %v1253, 1.0
    %v1255 = vrcp.pop %v1254
    %v1256 = vmul.f32 %v1254, %v1255
    %v1257 = vsub.f32 1.0, %v1256
    %v1258 = vmul.f32 %v1255, %v1257
    %v1259 = vadd.f32 %v1255, %v1258
    %vm1260 = vweird.f32 %v1254
    %vm1261 = vweird.f32 %v1255
    %vm1262 = vmor %vm1260, %vm1261
    %v1263 = vsel %vm1262, %v1255, %v1259
    %v1264 = vand.u32 2147483647, %v1254
    %vm1265 = vcmp.eq.f32.partialorder %v1264, 8.507059e+37
    %v1266 = vand.u32 %v1254, 2147483648
    %v1267 = vor.u32 1.1754944e-38, %v1266
    %v1268 = vsel %vm1265, %v1267, %v1263
    %v1269 = vmul.f32 1.0, %v1268
    %v1270 = vtanh.pop %v1249
    %v1271 = vmul.f32 %v1269, %v1152
    %1273 = vrot.lane.b32.xlu0 %v1270, 32
    %v1274 = vpop.permute.xlu0 %1273
    %v1276 = vmul.f32 %v1269, %v1274
    %1278 = vrot.lane.b32.xlu0 %v1276, 32
    %v1279 = vpop.permute.xlu0 %1278
    %v1281 = vadd.f32 %v1271, %v1279
    %v1282 = vtanh.pop %v1281
    %1284 = vrot.lane.b32.xlu0 %v1282, 32
    %v1285 = vpop.permute.xlu0 %1284
    %v1287 = vmul.f32 %v1269, %v1285
    %v1288 = vsel %vm374, %v1221, 0
    %1290 = vmatpush.msra.mxu0 0.0
    %1291 = vmatpush.msra.mxu0 0.0
    %1292 = vmatpush.msra.mxu0 0.0
    %1293 = vmatpush.msra.mxu0 0.0
    %1294 = vmatpush.msra.mxu0 0.0
    %1295 = vmatpush.msra.mxu0 0.0
    %1296 = vmatpush.msra.mxu0 0.0
    %1297 = vmatpush.msra.mxu0 0.0
    %1298 = vmatpush.msra.mxu0 0.0
    %1299 = vmatpush.msra.mxu0 0.0
    %1300 = vmatpush.msra.mxu0 0.0
    %1301 = vmatpush.msra.mxu0 0.0
    %1302 = vmatpush.msra.mxu0 %v373
    %1303 = vmatpush.msra.mxu0 %v372
    %1304 = vmatpush.msra.mxu0 %v371
    %1305 = vmatpush.msra.mxu0 %v370
    %1306 = vmatmul.f32.gmra.mxu0 %v1288
    %v1307 = vpop.f32.mrf.mxu0
    %v1308 = vadd.f32 0.0, %v1307
    %1309 = vdwg.mxu0
    %v1310 = vadd.f32 %v368, %v1308
    %v1311 = vxor.u32 %v1310, 2147483648
    %v1312 = vmul.f32 %v1311, 1.442695
    %v1313 = vpow.pop %v1312
    %v1314 = vadd.f32 %v1313, 1.0
    %v1315 = vrcp.pop %v1314
    %v1316 = vmul.f32 %v1314, %v1315
    %v1317 = vsub.f32 1.0, %v1316
    %v1318 = vmul.f32 %v1315, %v1317
    %v1319 = vadd.f32 %v1315, %v1318
    %vm1320 = vweird.f32 %v1314
    %vm1321 = vweird.f32 %v1315
    %vm1322 = vmor %vm1320, %vm1321
    %v1323 = vsel %vm1322, %v1315, %v1319
    %v1324 = vand.u32 2147483647, %v1314
    %vm1325 = vcmp.eq.f32.partialorder %v1324, 8.507059e+37
    %v1326 = vand.u32 %v1314, 2147483648
    %v1327 = vor.u32 1.1754944e-38, %v1326
    %v1328 = vsel %vm1325, %v1327, %v1323
    %v1329 = vmul.f32 1.0, %v1328
    %v1330 = vtanh.pop %v1310
    %v1331 = vmul.f32 %v1329, %v1212
    %1333 = vrot.lane.b32.xlu0 %v1330, 32
    %v1334 = vpop.permute.xlu0 %1333
    %v1336 = vmul.f32 %v1329, %v1334
    %1338 = vrot.lane.b32.xlu0 %v1336, 32
    %v1339 = vpop.permute.xlu0 %1338
    %v1341 = vadd.f32 %v1331, %v1339
    %v1342 = vtanh.pop %v1341
    %1344 = vrot.lane.b32.xlu0 %v1342, 32
    %v1345 = vpop.permute.xlu0 %1344
    %v1347 = vmul.f32 %v1329, %v1345
    %1349 = vrot.lane.b32.xlu0 %v1347, 64
    %v1350 = vpop.permute.xlu0 %1349
    %1353 = vrot.lane.b32.xlu0 %v1287, 96
    %v1354 = vpop.permute.xlu0 %1353
    %v1356 = vsel %vm374, %v1350, %v1354
    %v1358 = vsel %vm453, %v1356, 0
    %1360 = vmatpush.msra.mxu0 0.0
    %1361 = vmatpush.msra.mxu0 0.0
    %1362 = vmatpush.msra.mxu0 0.0
    %1363 = vmatpush.msra.mxu0 0.0
    %1364 = vmatpush.msra.mxu0 0.0
    %1365 = vmatpush.msra.mxu0 0.0
    %1366 = vmatpush.msra.mxu0 0.0
    %1367 = vmatpush.msra.mxu0 0.0
    %1368 = vmatpush.msra.mxu0 %v448
    %1369 = vmatpush.msra.mxu0 %v447
    %1370 = vmatpush.msra.mxu0 %v446
    %1371 = vmatpush.msra.mxu0 %v445
    %1372 = vmatpush.msra.mxu0 %v444
    %1373 = vmatpush.msra.mxu0 %v443
    %1374 = vmatpush.msra.mxu0 %v442
    %1375 = vmatpush.msra.mxu0 %v441
    %1376 = vmatmul.f32.gmra.mxu0 %v1358
    %v1377 = vpop.f32.mrf.mxu0
    %v1378 = vadd.f32 %v451, %v1377
    %1379 = vdwg.mxu0
    %v1380 = vxor.u32 %v1378, 2147483648
    %v1381 = vmul.f32 %v1380, 1.442695
    %v1382 = vpow.pop %v1381
    %v1383 = vadd.f32 %v1382, 1.0
    %v1384 = vrcp.pop %v1383
    %v1385 = vmul.f32 %v1383, %v1384
    %v1386 = vsub.f32 1.0, %v1385
    %v1387 = vmul.f32 %v1384, %v1386
    %v1388 = vadd.f32 %v1384, %v1387
    %vm1389 = vweird.f32 %v1383
    %vm1390 = vweird.f32 %v1384
    %vm1391 = vmor %vm1389, %vm1390
    %v1392 = vsel %vm1391, %v1384, %v1388
    %v1393 = vand.u32 2147483647, %v1383
    %vm1394 = vcmp.eq.f32.partialorder %v1393, 8.507059e+37
    %v1395 = vand.u32 %v1383, 2147483648
    %v1396 = vor.u32 1.1754944e-38, %v1395
    %v1397 = vsel %vm1394, %v1396, %v1392
    %v1398 = vmul.f32 1.0, %v1397
    %v1399 = vtanh.pop %v1378
    %v1400 = vmul.f32 %v1398, %v1281
    %1402 = vrot.lane.b32.xlu0 %v1399, 32
    %v1403 = vpop.permute.xlu0 %1402
    %v1405 = vmul.f32 %v1398, %v1403
    %1407 = vrot.lane.b32.xlu0 %v1405, 32
    %v1408 = vpop.permute.xlu0 %1407
    %v1410 = vadd.f32 %v1400, %v1408
    %v1411 = vtanh.pop %v1410
    %1413 = vrot.lane.b32.xlu0 %v1411, 32
    %v1414 = vpop.permute.xlu0 %1413
    %v1416 = vmul.f32 %v1398, %v1414
    %v1417 = vld [vmem:[#allocation13] sm:$0xff]
    %v1418 = vld [vmem:[#allocation13 + $0x8] sm:$0xff]
    %v1419 = vld [vmem:[#allocation13 + $0x10] sm:$0xff]
    %v1420 = vld [vmem:[#allocation13 + $0x18] sm:$0xff]
    %v1421 = vld [vmem:[#allocation14] sm:$0x1]
    %v1423 = vperm.slane %v1421, 0
    %1426 = vrot.lane.b32.xlu0 %v513, 64
    %v1427 = vpop.permute.xlu0 %1426
    %1428 = vrot.lane.b32.xlu0 %v642, 64
    %v1429 = vpop.permute.xlu0 %1428
    %1430 = vrot.lane.b32.xlu0 %v771, 64
    %v1431 = vpop.permute.xlu0 %1430
    %1432 = vrot.lane.b32.xlu0 %v900, 64
    %v1433 = vpop.permute.xlu0 %1432
    %1434 = vrot.lane.b32.xlu0 %v1029, 64
    %v1435 = vpop.permute.xlu0 %1434
    %1436 = vrot.lane.b32.xlu0 %v1158, 64
    %v1437 = vpop.permute.xlu0 %1436
    %1438 = vrot.lane.b32.xlu0 %v1287, 64
    %v1439 = vpop.permute.xlu0 %1438
    %1440 = vrot.lane.b32.xlu0 %v1416, 64
    %v1441 = vpop.permute.xlu0 %1440
    %v1442 = vsel %vm374, %v1427, 0
    %v1444 = vsel %vm374, %v1429, 0
    %v1446 = vsel %vm374, %v1431, 0
    %v1448 = vsel %vm374, %v1433, 0
    %v1450 = vsel %vm374, %v1435, 0
    %v1452 = vsel %vm374, %v1437, 0
    %v1454 = vsel %vm374, %v1439, 0
    %v1456 = vsel %vm374, %v1441, 0
    %1458 = vmatpush.msra.mxu0 0.0
    %1459 = vmatpush.msra.mxu0 0.0
    %1460 = vmatpush.msra.mxu0 0.0
    %1461 = vmatpush.msra.mxu0 0.0
    %1462 = vmatpush.msra.mxu0 0.0
    %1463 = vmatpush.msra.mxu0 0.0
    %1464 = vmatpush.msra.mxu0 0.0
    %1465 = vmatpush.msra.mxu0 0.0
    %1466 = vmatpush.msra.mxu0 0.0
    %1467 = vmatpush.msra.mxu0 0.0
    %1468 = vmatpush.msra.mxu0 0.0
    %1469 = vmatpush.msra.mxu0 0.0
    %1470 = vmatpush.msra.mxu0 %v1420
    %1471 = vmatpush.msra.mxu0 %v1419
    %1472 = vmatpush.msra.mxu0 %v1418
    %1473 = vmatpush.msra.mxu0 %v1417
    %1474 = vmatmul.f32.gmra.mxu0 %v1442
    %v1475 = vpop.f32.mrf.mxu0
    %v1476 = vadd.f32 %v1423, %v1475
    %1477 = vmatmul.f32.gmra.mxu0 %v1444
    %v1478 = vpop.f32.mrf.mxu0
    %v1479 = vadd.f32 %v1423, %v1478
    %1480 = vmatmul.f32.gmra.mxu0 %v1446
    %v1481 = vpop.f32.mrf.mxu0
    %v1482 = vadd.f32 %v1423, %v1481
    %1483 = vmatmul.f32.gmra.mxu0 %v1448
    %v1484 = vpop.f32.mrf.mxu0
    %v1485 = vadd.f32 %v1423, %v1484
    %1486 = vmatmul.f32.gmra.mxu0 %v1450
    %v1487 = vpop.f32.mrf.mxu0
    %v1488 = vadd.f32 %v1423, %v1487
    %1489 = vmatmul.f32.gmra.mxu0 %v1452
    %v1490 = vpop.f32.mrf.mxu0
    %v1491 = vadd.f32 %v1423, %v1490
    %1492 = vmatmul.f32.gmra.mxu0 %v1454
    %v1493 = vpop.f32.mrf.mxu0
    %v1494 = vadd.f32 %v1423, %v1493
    %1495 = vmatmul.f32.gmra.mxu0 %v1456
    %v1496 = vpop.f32.mrf.mxu0
    %v1497 = vadd.f32 %v1423, %v1496
    %1498 = vdwg.mxu0
    %vm1499 = vcmp.gt.f32.partialorder %v1476, 0.0
    %vm1500 = vcmp.gt.f32.partialorder %v1479, 0.0
    %vm1501 = vcmp.gt.f32.partialorder %v1482, 0.0
    %vm1502 = vcmp.gt.f32.partialorder %v1485, 0.0
    %vm1503 = vcmp.gt.f32.partialorder %v1488, 0.0
    %vm1504 = vcmp.gt.f32.partialorder %v1491, 0.0
    %vm1505 = vcmp.gt.f32.partialorder %v1494, 0.0
    %vm1506 = vcmp.gt.f32.partialorder %v1497, 0.0
    %v1507 = vmul.f32 %v286, %v1476
    %v1508 = vmul.f32 %v286, %v1479
    %v1509 = vmul.f32 %v286, %v1482
    %v1510 = vmul.f32 %v286, %v1485
    %v1511 = vmul.f32 %v286, %v1488
    %v1512 = vmul.f32 %v286, %v1491
    %v1513 = vmul.f32 %v286, %v1494
    %v1514 = vmul.f32 %v286, %v1497
    %v1515 = vsel %vm1499, %v1476, %v1507
    %v1516 = vsel %vm1500, %v1479, %v1508
    %v1517 = vsel %vm1501, %v1482, %v1509
    %v1518 = vsel %vm1502, %v1485, %v1510
    %v1519 = vsel %vm1503, %v1488, %v1511
    %v1520 = vsel %vm1504, %v1491, %v1512
    %v1521 = vsel %vm1505, %v1494, %v1513
    %v1522 = vsel %vm1506, %v1497, %v1514
    %v1523 = vld [vmem:[#allocation16] sm:$0xff]
    %v1524 = vld [vmem:[#allocation16 + $0x8] sm:$0xff]
    %v1525 = vld [vmem:[#allocation16 + $0x10] sm:$0xff]
    %v1526 = vld [vmem:[#allocation16 + $0x18] sm:$0xff]
    %v1527 = vld [vmem:[%s14] sm:$0x1]
    %v1529 = vperm.slane %v1527, 0
    %v1532 = vsel %vm374, %v1515, 0
    %v1535 = vsel %vm374, %v1516, 0
    %v1538 = vsel %vm374, %v1517, 0
    %v1541 = vsel %vm374, %v1518, 0
    %v1544 = vsel %vm374, %v1519, 0
    %v1547 = vsel %vm374, %v1520, 0
    %v1550 = vsel %vm374, %v1521, 0
    %v1553 = vsel %vm374, %v1522, 0
    %1555 = vmatpush.msra.mxu0 0.0
    %1556 = vmatpush.msra.mxu0 0.0
    %1557 = vmatpush.msra.mxu0 0.0
    %1558 = vmatpush.msra.mxu0 0.0
    %1559 = vmatpush.msra.mxu0 0.0
    %1560 = vmatpush.msra.mxu0 0.0
    %1561 = vmatpush.msra.mxu0 0.0
    %1562 = vmatpush.msra.mxu0 0.0
    %1563 = vmatpush.msra.mxu0 0.0
    %1564 = vmatpush.msra.mxu0 0.0
    %1565 = vmatpush.msra.mxu0 0.0
    %1566 = vmatpush.msra.mxu0 0.0
    %1567 = vmatpush.msra.mxu0 %v1526
    %1568 = vmatpush.msra.mxu0 %v1525
    %1569 = vmatpush.msra.mxu0 %v1524
    %1570 = vmatpush.msra.mxu0 %v1523
    %1571 = vmatmul.f32.gmra.mxu0 %v1532
    %v1572 = vpop.f32.mrf.mxu0
    %v1573 = vadd.f32 %v1529, %v1572
    %1574 = vmatmul.f32.gmra.mxu0 %v1535
    %v1575 = vpop.f32.mrf.mxu0
    %v1576 = vadd.f32 %v1529, %v1575
    %1577 = vmatmul.f32.gmra.mxu0 %v1538
    %v1578 = vpop.f32.mrf.mxu0
    %v1579 = vadd.f32 %v1529, %v1578
    %1580 = vmatmul.f32.gmra.mxu0 %v1541
    %v1581 = vpop.f32.mrf.mxu0
    %v1582 = vadd.f32 %v1529, %v1581
    %1583 = vmatmul.f32.gmra.mxu0 %v1544
    %v1584 = vpop.f32.mrf.mxu0
    %v1585 = vadd.f32 %v1529, %v1584
    %1586 = vmatmul.f32.gmra.mxu0 %v1547
    %v1587 = vpop.f32.mrf.mxu0
    %v1588 = vadd.f32 %v1529, %v1587
    %1589 = vmatmul.f32.gmra.mxu0 %v1550
    %v1590 = vpop.f32.mrf.mxu0
    %v1591 = vadd.f32 %v1529, %v1590
    %1592 = vmatmul.f32.gmra.mxu0 %v1553
    %v1593 = vpop.f32.mrf.mxu0
    %v1594 = vadd.f32 %v1529, %v1593
    %1595 = vdwg.mxu0
    %vm1596 = vcmp.gt.f32.partialorder %v1573, 0.0
    %vm1597 = vcmp.gt.f32.partialorder %v1576, 0.0
    %vm1598 = vcmp.gt.f32.partialorder %v1579, 0.0
    %vm1599 = vcmp.gt.f32.partialorder %v1582, 0.0
    %vm1600 = vcmp.gt.f32.partialorder %v1585, 0.0
    %vm1601 = vcmp.gt.f32.partialorder %v1588, 0.0
    %vm1602 = vcmp.gt.f32.partialorder %v1591, 0.0
    %vm1603 = vcmp.gt.f32.partialorder %v1594, 0.0
    %v1604 = vmul.f32 %v286, %v1573
    %v1605 = vmul.f32 %v286, %v1576
    %v1606 = vmul.f32 %v286, %v1579
    %v1607 = vmul.f32 %v286, %v1582
    %v1608 = vmul.f32 %v286, %v1585
    %v1609 = vmul.f32 %v286, %v1588
    %v1610 = vmul.f32 %v286, %v1591
    %v1611 = vmul.f32 %v286, %v1594
    %v1612 = vsel %vm1596, %v1573, %v1604
    %v1613 = vsel %vm1597, %v1576, %v1605
    %v1614 = vsel %vm1598, %v1579, %v1606
    %v1615 = vsel %vm1599, %v1582, %v1607
    %v1616 = vsel %vm1600, %v1585, %v1608
    %v1617 = vsel %vm1601, %v1588, %v1609
    %v1618 = vsel %vm1602, %v1591, %v1610
    %v1619 = vsel %vm1603, %v1594, %v1611
    %v1620 = vld [vmem:[#allocation17] sm:$0xff]
    %v1621 = vld [vmem:[#allocation17 + $0x8] sm:$0xff]
    %v1622 = vld [vmem:[#allocation17 + $0x10] sm:$0xff]
    %v1623 = vld [vmem:[#allocation17 + $0x18] sm:$0xff]
    %v1624 = vld [vmem:[%s16] sm:$0x1]
    %v1626 = vperm.slane %v1624, 0
    %v1629 = vsel %vm374, %v1612, 0
    %v1632 = vsel %vm374, %v1613, 0
    %v1635 = vsel %vm374, %v1614, 0
    %v1638 = vsel %vm374, %v1615, 0
    %v1641 = vsel %vm374, %v1616, 0
    %v1644 = vsel %vm374, %v1617, 0
    %v1647 = vsel %vm374, %v1618, 0
    %v1650 = vsel %vm374, %v1619, 0
    %1652 = vmatpush.msra.mxu0 0.0
    %1653 = vmatpush.msra.mxu0 0.0
    %1654 = vmatpush.msra.mxu0 0.0
    %1655 = vmatpush.msra.mxu0 0.0
    %1656 = vmatpush.msra.mxu0 0.0
    %1657 = vmatpush.msra.mxu0 0.0
    %1658 = vmatpush.msra.mxu0 0.0
    %1659 = vmatpush.msra.mxu0 0.0
    %1660 = vmatpush.msra.mxu0 0.0
    %1661 = vmatpush.msra.mxu0 0.0
    %1662 = vmatpush.msra.mxu0 0.0
    %1663 = vmatpush.msra.mxu0 0.0
    %1664 = vmatpush.msra.mxu0 %v1623
    %1665 = vmatpush.msra.mxu0 %v1622
    %1666 = vmatpush.msra.mxu0 %v1621
    %1667 = vmatpush.msra.mxu0 %v1620
    %1668 = vmatmul.f32.gmra.mxu0 %v1629
    %v1669 = vpop.f32.mrf.mxu0
    %v1670 = vadd.f32 %v1626, %v1669
    %1671 = vmatmul.f32.gmra.mxu0 %v1632
    %v1672 = vpop.f32.mrf.mxu0
    %v1673 = vadd.f32 %v1626, %v1672
    %1674 = vmatmul.f32.gmra.mxu0 %v1635
    %v1675 = vpop.f32.mrf.mxu0
    %v1676 = vadd.f32 %v1626, %v1675
    %1677 = vmatmul.f32.gmra.mxu0 %v1638
    %v1678 = vpop.f32.mrf.mxu0
    %v1679 = vadd.f32 %v1626, %v1678
    %1680 = vmatmul.f32.gmra.mxu0 %v1641
    %v1681 = vpop.f32.mrf.mxu0
    %v1682 = vadd.f32 %v1626, %v1681
    %1683 = vmatmul.f32.gmra.mxu0 %v1644
    %v1684 = vpop.f32.mrf.mxu0
    %v1685 = vadd.f32 %v1626, %v1684
    %1686 = vmatmul.f32.gmra.mxu0 %v1647
    %v1687 = vpop.f32.mrf.mxu0
    %v1688 = vadd.f32 %v1626, %v1687
    %1689 = vmatmul.f32.gmra.mxu0 %v1650
    %v1690 = vpop.f32.mrf.mxu0
    %v1691 = vadd.f32 %v1626, %v1690
    %1692 = vdwg.mxu0
    %vm1693 = vcmp.gt.f32.partialorder %v1670, 0.0
    %vm1694 = vcmp.gt.f32.partialorder %v1673, 0.0
    %vm1695 = vcmp.gt.f32.partialorder %v1676, 0.0
    %vm1696 = vcmp.gt.f32.partialorder %v1679, 0.0
    %vm1697 = vcmp.gt.f32.partialorder %v1682, 0.0
    %vm1698 = vcmp.gt.f32.partialorder %v1685, 0.0
    %vm1699 = vcmp.gt.f32.partialorder %v1688, 0.0
    %vm1700 = vcmp.gt.f32.partialorder %v1691, 0.0
    %v1701 = vmul.f32 %v286, %v1670
    %v1702 = vmul.f32 %v286, %v1673
    %v1703 = vmul.f32 %v286, %v1676
    %v1704 = vmul.f32 %v286, %v1679
    %v1705 = vmul.f32 %v286, %v1682
    %v1706 = vmul.f32 %v286, %v1685
    %v1707 = vmul.f32 %v286, %v1688
    %v1708 = vmul.f32 %v286, %v1691
    %v1709 = vsel %vm1693, %v1670, %v1701
    %v1710 = vsel %vm1694, %v1673, %v1702
    %v1711 = vsel %vm1695, %v1676, %v1703
    %v1712 = vsel %vm1696, %v1679, %v1704
    %v1713 = vsel %vm1697, %v1682, %v1705
    %v1714 = vsel %vm1698, %v1685, %v1706
    %v1715 = vsel %vm1699, %v1688, %v1707
    %v1716 = vsel %vm1700, %v1691, %v1708
    %v1717 = vld [vmem:[%s17] sm:$0xff]
    %v1718 = vld [vmem:[%s17 + $0x8] sm:$0xff]
    %v1719 = vld [vmem:[%s17 + $0x10] sm:$0xff]
    %v1720 = vld [vmem:[%s17 + $0x18] sm:$0xff]
    %v1721 = vld [vmem:[%s18] sm:$0x1]
    %v1723 = vperm.slane %v1721, 0
    %v1726 = vsel %vm374, %v1709, 0
    %v1729 = vsel %vm374, %v1710, 0
    %v1732 = vsel %vm374, %v1711, 0
    %v1735 = vsel %vm374, %v1712, 0
    %v1738 = vsel %vm374, %v1713, 0
    %v1741 = vsel %vm374, %v1714, 0
    %v1744 = vsel %vm374, %v1715, 0
    %v1747 = vsel %vm374, %v1716, 0
    %1749 = vmatpush.msra.mxu0 0.0
    %1750 = vmatpush.msra.mxu0 0.0
    %1751 = vmatpush.msra.mxu0 0.0
    %1752 = vmatpush.msra.mxu0 0.0
    %1753 = vmatpush.msra.mxu0 0.0
    %1754 = vmatpush.msra.mxu0 0.0
    %1755 = vmatpush.msra.mxu0 0.0
    %1756 = vmatpush.msra.mxu0 0.0
    %1757 = vmatpush.msra.mxu0 0.0
    %1758 = vmatpush.msra.mxu0 0.0
    %1759 = vmatpush.msra.mxu0 0.0
    %1760 = vmatpush.msra.mxu0 0.0
    %1761 = vmatpush.msra.mxu0 %v1720
    %1762 = vmatpush.msra.mxu0 %v1719
    %1763 = vmatpush.msra.mxu0 %v1718
    %1764 = vmatpush.msra.mxu0 %v1717
    %1765 = vmatmul.f32.gmra.mxu0 %v1726
    %v1766 = vpop.f32.mrf.mxu0
    %v1767 = vadd.f32 %v1723, %v1766
    %1768 = vmatmul.f32.gmra.mxu0 %v1729
    %v1769 = vpop.f32.mrf.mxu0
    %v1770 = vadd.f32 %v1723, %v1769
    %1771 = vmatmul.f32.gmra.mxu0 %v1732
    %v1772 = vpop.f32.mrf.mxu0
    %v1773 = vadd.f32 %v1723, %v1772
    %1774 = vmatmul.f32.gmra.mxu0 %v1735
    %v1775 = vpop.f32.mrf.mxu0
    %v1776 = vadd.f32 %v1723, %v1775
    %1777 = vmatmul.f32.gmra.mxu0 %v1738
    %v1778 = vpop.f32.mrf.mxu0
    %v1779 = vadd.f32 %v1723, %v1778
    %1780 = vmatmul.f32.gmra.mxu0 %v1741
    %v1781 = vpop.f32.mrf.mxu0
    %v1782 = vadd.f32 %v1723, %v1781
    %1783 = vmatmul.f32.gmra.mxu0 %v1744
    %v1784 = vpop.f32.mrf.mxu0
    %v1785 = vadd.f32 %v1723, %v1784
    %1786 = vmatmul.f32.gmra.mxu0 %v1747
    %v1787 = vpop.f32.mrf.mxu0
    %v1788 = vadd.f32 %v1723, %v1787
    %1789 = vdwg.mxu0
    %1791 = vrot.lane.b32.xlu0 %v1770, 2
    %v1792 = vpop.permute.xlu0 %1791
    %1795 = vrot.lane.b32.xlu0 %v1773, 4
    %v1796 = vpop.permute.xlu0 %1795
    %1799 = vrot.lane.b32.xlu0 %v1776, 6
    %v1800 = vpop.permute.xlu0 %1799
    %1803 = vrot.lane.b32.xlu0 %v1779, 8
    %v1804 = vpop.permute.xlu0 %1803
    %1807 = vrot.lane.b32.xlu0 %v1782, 10
    %v1808 = vpop.permute.xlu0 %1807
    %1811 = vrot.lane.b32.xlu0 %v1785, 12
    %v1812 = vpop.permute.xlu0 %1811
    %1815 = vrot.lane.b32.xlu0 %v1788, 14
    %v1816 = vpop.permute.xlu0 %1815
    %vm1818 = vcmask 15360
    %v1819 = vsel %vm1818, %v1767, %v1792
    %v1820 = vsel %vm243, %v1819, %v1796
    %vm1821 = vcmask 48128
    %v1822 = vsel %vm1821, %v1820, %v1800
    %v1823 = vsel %vm245, %v1822, %v1804
    %vm1824 = vcmask 80896
    %v1825 = vsel %vm1824, %v1823, %v1808
    %v1826 = vsel %vm247, %v1825, %v1812
    %v1827 = vsel %vm257, %v1826, %v1816
    %vm1828 = vcmask 123904
    %1829 = vst.msk [vmem:[%s19] sm:$0x3] %vm1828, %v1827
    // Predicated region
    $region118: #{traj_generator_forward.1} parent=1 // pred_check
      _
    $region119: #{traj_generator_forward.1} parent=1 // pred_check_branch
      %1831 = sbr.rel (0) target = $region121
    $region120: #{traj_generator_forward.1} parent=1 // pred_region
      _
    $region121: #{traj_generator_forward.1} parent=1 // pred_fallthru
      _
    // Predicated region
    $region122: #{traj_generator_forward.1} parent=1 // pred_check
      _
    $region123: #{traj_generator_forward.1} parent=1 // pred_check_branch
      %1833 = sbr.rel (0) target = $region125
    $region124: #{traj_generator_forward.1} parent=1 // pred_region
      _
    $region125: #{traj_generator_forward.1} parent=1 // pred_fallthru
      _
    %1834 = vsyncpa [#allocation4], 1
    %1835 = vsyncpa [#allocation6], 1
    %1836 = vsyncpa [#allocation9], 1
    %1837 = vsyncpa [#allocation12], 1
    %1838 = vsyncpa [#allocation15], 1
    %1839 = vsyncpa [#allocation18], 1

</llo_original>
